<compile_context>
chip_gen: v7x
topology: tpu7x:2x2x1
jax: 0.10.0
libtpu: 0.0.40
codegen_flags: <defaults>
</compile_context>

<pallas_src>
import functools

import jax
import jax.numpy as jnp
from jax.experimental import pallas as pl
from jax.experimental.pallas import tpu as pltpu


def _ru(n, m):
    return ((n + m - 1) // m) * m


def decoder_kernel(
    x_ref, h0_ref, c0_ref, enc_ref,
    wa_h_ref, wa_e_ref, ba_ref, v_ref,
    w_lstm_ref, b_lstm_ref, w_fc_ref, b_fc_ref,
    pred_ref, h_out_ref, c_out_ref,
    h_sc, c_sc, ee_sc, z_sc,
):
    step = pl.program_id(0)
    enc = enc_ref[...]                      # (bsP, T, eh) f32, resident across steps
    bsP, T, eh = enc.shape
    dh = h_sc.shape[-1]
    in_size = x_ref.shape[-1]
    o_x, o_w, o_h = 0, in_size, in_size + eh   # tight segment offsets in z

    @pl.when(step == 0)
    def _init():
        # Recurrent state lives in VMEM scratch for the whole decode.
        h_sc[...] = h0_ref[...]
        c_sc[...] = c0_ref[...]
        # Encoder-side additive-attention projection is step-invariant: compute once.
        # TODO(synk): the (bsP,T,eh)->(bsP*T,eh) merge is only a free layout reshape
        #             when T % 8 == 0; otherwise it materializes a copy (still only
        #             once per decode).
        enc2d = enc.reshape(bsP * T, eh)
        ee = jnp.dot(enc2d, wa_e_ref[...], preferred_element_type=jnp.float32)
        ee_sc[...] = ee.reshape(bsP, T, dh) + ba_ref[...][None, :, :]
        # Only the tail lanes past the 80-wide concat need zeros (NaN*0 guard against
        # the zero-padded weight rows); the real segments are overwritten every step.
        z_sc[...] = jnp.zeros_like(z_sc)

    x = x_ref[0]                            # (bsP, in) f32
    h = h_sc[...]                           # (bsP, dh)
    c = c_sc[...]                           # (bsP, dh)

    # ---- additive (Bahdanau) attention --------------------------------------
    e_h = jnp.dot(h, wa_h_ref[...], preferred_element_type=jnp.float32)   # (bsP, dh)
    energy = jnp.tanh(e_h[:, None, :] + ee_sc[...])                       # (bsP, T, dh)
    scores = jnp.sum(energy * v_ref[...][None, :, :], axis=-1)            # (bsP, T)
    scores = scores - jnp.max(scores, axis=-1, keepdims=True)
    p = jnp.exp(scores)
    inv_den = pl.reciprocal(jnp.sum(p, axis=-1, keepdims=True), approx=True)  # EUP
    a = p * inv_den                                                        # (bsP, T)
    weighted = jnp.sum(a[:, :, None] * enc, axis=1)                        # (bsP, eh)

    # ---- single-step LSTM: one fused bf16 MXU contraction over [x | weighted | h]
    z_sc[:, o_x:o_x + in_size] = x
    z_sc[:, o_w:o_w + eh] = weighted
    z_sc[:, o_h:o_h + dh] = h
    gates = (jnp.dot(z_sc[...].astype(jnp.bfloat16), w_lstm_ref[...],
                     preferred_element_type=jnp.float32)
             + b_lstm_ref[...])                                            # (bsP, 4*dh)

    # PyTorch gate order: i, f, g, o
    i_g = jax.nn.sigmoid(gates[:, 0 * dh:1 * dh])
    f_g = jax.nn.sigmoid(gates[:, 1 * dh:2 * dh])
    g_g = jnp.tanh(gates[:, 2 * dh:3 * dh])
    o_g = jax.nn.sigmoid(gates[:, 3 * dh:4 * dh])
    c_new = f_g * c + i_g * g_g
    h_new = o_g * jnp.tanh(c_new)

    # ---- fc_out([output ; weighted ; input]) reuses the SAME scratch: only the h
    #      segment changes (w_fc rows are packed in the same [x | weighted | h] order).
    z_sc[:, o_h:o_h + dh] = h_new
    pred = (jnp.dot(z_sc[...].astype(jnp.bfloat16), w_fc_ref[...],
                    preferred_element_type=jnp.float32)
            + b_fc_ref[...])                                               # (bsP, out_pad)

    pred_ref[0] = pred                       # lane-dense (out_pad multiple of 128) store
    h_sc[...] = h_new
    c_sc[...] = c_new
    h_out_ref[...] = h_new
    c_out_ref[...] = c_new


def pack_params(p, input_size, enc_hid, dec_hid, out_size):
    """One-time layout plumbing: tightly packed, zero-padded, bf16 fused weights."""
    f32, bf16 = jnp.float32, jnp.bfloat16
    o_x, o_w, o_h = 0, input_size, input_size + enc_hid
    k_pad = _ru(input_size + enc_hid + dec_hid, 128)
    out_pad = _ru(out_size, 128)

    w_lstm = jnp.zeros((k_pad, 4 * dec_hid), f32)
    w_lstm = w_lstm.at[o_x:o_x + input_size].set(p["wih_x"])
    w_lstm = w_lstm.at[o_w:o_w + enc_hid].set(p["wih_w"])
    w_lstm = w_lstm.at[o_h:o_h + dec_hid].set(p["whh"])

    w_fc = jnp.zeros((k_pad, out_pad), f32)
    w_fc = w_fc.at[o_x:o_x + input_size, :out_size].set(p["wfc_x"])
    w_fc = w_fc.at[o_w:o_w + enc_hid, :out_size].set(p["wfc_w"])
    w_fc = w_fc.at[o_h:o_h + dec_hid, :out_size].set(p["wfc_h"])
    b_fc = jnp.zeros((1, out_pad), f32).at[:, :out_size].set(p["b_fc"])

    return {
        "wa_h": p["wa_h"].astype(f32), "wa_e": p["wa_e"].astype(f32),
        "ba": p["ba"].astype(f32), "v": p["v"].astype(f32),
        "w_lstm": w_lstm.astype(bf16), "b_lstm": p["b_lstm"].astype(f32),
        "w_fc": w_fc.astype(bf16), "b_fc": b_fc,
    }


@functools.partial(jax.jit, static_argnames=("out_size",))
def seq2seq_decoder_decode(x_seq, h0, c0, enc, packed, *, out_size):
    """Fused multi-step (teacher-forced) decode in ONE pallas_call.

    x_seq : (n_steps, bs, input_size)   -- per-step PyTorch `input` (seq dim squeezed)
    h0,c0 : (1, bs, dec_hid)            -- PyTorch `hidden`, `c`
    enc   : (bs, seq, enc_hid)          -- PyTorch `encoder_outputs`
    returns (predictions (n_steps, bs, out_size), hidden (1,bs,dh), final_c (1,bs,dh))
    """
    n_steps, bs, in_size = x_seq.shape
    dh = h0.shape[-1]
    T, eh = enc.shape[1], enc.shape[2]
    k_pad = packed["w_lstm"].shape[0]
    g4 = packed["w_lstm"].shape[-1]          # 4 * dec_hid
    out_pad = packed["b_fc"].shape[-1]
    assert in_size + eh + dh <= k_pad

    # Pad the batch (sublane) dim ONCE for the whole decode; zero rows are harmless
    # and sliced off at the end.
    bsP = _ru(bs, 8)
    pad_b = bsP - bs
    x_p = jnp.pad(x_seq, ((0, 0), (0, pad_b), (0, 0)))
    h_p = jnp.pad(h0[0], ((0, pad_b), (0, 0)))
    c_p = jnp.pad(c0[0], ((0, pad_b), (0, 0)))
    enc_p = jnp.pad(enc, ((0, pad_b), (0, 0), (0, 0)))

    kernel_args = (
        x_p, h_p, c_p, enc_p,
        packed["wa_h"], packed["wa_e"], packed["ba"], packed["v"],
        packed["w_lstm"], packed["b_lstm"], packed["w_fc"], packed["b_fc"],
    )

    const2 = lambda s: (0, 0)
    const3 = lambda s: (0, 0, 0)
    in_specs = [
        pl.BlockSpec((1, bsP, in_size), lambda s: (s, 0, 0)),   # x at step s
        pl.BlockSpec((bsP, dh), const2),                        # h0 (read @ step 0 only)
        pl.BlockSpec((bsP, dh), const2),                        # c0 (read @ step 0 only)
        pl.BlockSpec((bsP, T, eh), const3),                     # encoder outputs (resident)
        pl.BlockSpec((dh, dh), const2),                         # wa_h   (DMA'd once)
        pl.BlockSpec((eh, dh), const2),                         # wa_e   (DMA'd once)
        pl.BlockSpec((1, dh), const2),                          # ba
        pl.BlockSpec((1, dh), const2),                          # v
        pl.BlockSpec((k_pad, g4), const2),                      # w_lstm (bf16, resident)
        pl.BlockSpec((1, g4), const2),                          # b_lstm
        pl.BlockSpec((k_pad, out_pad), const2),                 # w_fc   (bf16, resident)
        pl.BlockSpec((1, out_pad), const2),                     # b_fc
    ]
    out_specs = (
        pl.BlockSpec((1, bsP, out_pad), lambda s: (s, 0, 0)),   # per-step prediction
        pl.BlockSpec((bsP, dh), const2),                        # final hidden
        pl.BlockSpec((bsP, dh), const2),                        # final cell
    )
    out_shape = (
        jax.ShapeDtypeStruct((n_steps, bsP, out_pad), jnp.float32),
        jax.ShapeDtypeStruct((bsP, dh), jnp.float32),
        jax.ShapeDtypeStruct((bsP, dh), jnp.float32),
    )
    scratch_shapes = [
        pltpu.VMEM((bsP, dh), jnp.float32),       # h carry
        pltpu.VMEM((bsP, dh), jnp.float32),       # c carry
        pltpu.VMEM((bsP, T, dh), jnp.float32),    # enc @ Wa_e + ba (step-invariant)
        pltpu.VMEM((bsP, k_pad), jnp.float32),    # fused [x | weighted | h] concat
    ]

    # Advisory cost hint so XLA schedules surrounding ops around the kernel.
    per_step_flops = 2 * bsP * (dh * dh + k_pad * g4 + k_pad * out_pad) \
        + 6 * bsP * T * max(dh, eh)
    flops = n_steps * per_step_flops + 2 * bsP * T * eh * dh
    transcendentals = n_steps * bsP * (T * dh + T + 6 * dh + 1)
    in_bytes = sum(int(a.size) * a.dtype.itemsize for a in kernel_args)
    out_bytes = 4 * (n_steps * bsP * out_pad + 2 * bsP * dh)
    cost = pl.CostEstimate(flops=int(flops), transcendentals=int(transcendentals),
                           bytes_accessed=int(in_bytes + out_bytes))

    preds_p, h_new_p, c_new_p = pl.pallas_call(
        decoder_kernel,
        grid=(n_steps,),
        out_shape=out_shape,
        in_specs=in_specs,
        out_specs=out_specs,
        scratch_shapes=scratch_shapes,
        input_output_aliases={1: 1, 2: 2},      # h0 -> h_out, c0 -> c_out
        compiler_params=pltpu.CompilerParams(
            dimension_semantics=("arbitrary",),  # steps are sequential (state carry)
        ),
        cost_estimate=cost,
    )(*kernel_args)

    preds = preds_p[:, :bs, :out_size]
    return preds, h_new_p[:bs][None], c_new_p[:bs][None]


def seq2seq_decoder_step(x3, h3, c3, enc, packed, *, out_size):
    """Mirrors Seq2SeqDecoder.forward for num_layers=1 (single decode step).

    x3 : (bs, 1, input_size), h3/c3 : (1, bs, dec_hid), enc : (bs, seq, enc_hid)
    """
    x_seq = jnp.transpose(x3, (1, 0, 2))          # (1, bs, input_size)
    preds, h_new, c_new = seq2seq_decoder_decode(
        x_seq, h3, c3, enc, packed, out_size=out_size)
    return preds[0], h_new, c_new


def init_params(key, input_size, enc_hid, dec_hid, out_size):
    ks = jax.random.split(key, 8)
    s = 0.1
    f32 = jnp.float32

    # attention: Linear(enc_hid+dec_hid -> dec_hid) over cat(hidden, enc_out), then v: dec_hid -> 1
    wa = (jax.random.normal(ks[0], (dec_hid + enc_hid, dec_hid)) * s).astype(f32)
    ba = (jax.random.normal(ks[1], (1, dec_hid)) * s).astype(f32)
    v = (jax.random.normal(ks[2], (1, dec_hid)) * s).astype(f32)

    # LSTM: input is cat(input, weighted) -> [input_size | enc_hid], hidden dec_hid
    wih = (jax.random.normal(ks[3], (input_size + enc_hid, 4 * dec_hid)) * s).astype(f32)
    whh = (jax.random.normal(ks[4], (dec_hid, 4 * dec_hid)) * s).astype(f32)
    # b_ih + b_hh combined (a real checkpoint import must sum the two PyTorch biases)
    b_lstm = (jax.random.normal(ks[5], (1, 4 * dec_hid)) * s).astype(f32)

    # fc_out: cat(output, weighted, input) -> [dec_hid | enc_hid | input_size] -> out_size
    wfc = (jax.random.normal(ks[6], (dec_hid + enc_hid + input_size, out_size)) * s).astype(f32)
    b_fc = (jax.random.normal(ks[7], (1, out_size)) * s).astype(f32)

    return {
        "wa_h": wa[:dec_hid], "wa_e": wa[dec_hid:], "ba": ba, "v": v,
        "wih_x": wih[:input_size], "wih_w": wih[input_size:], "whh": whh, "b_lstm": b_lstm,
        "wfc_h": wfc[:dec_hid], "wfc_w": wfc[dec_hid:dec_hid + enc_hid],
        "wfc_x": wfc[dec_hid + enc_hid:], "b_fc": b_fc,
    }


def reference_step(x3, h3, c3, enc, p):
    """Pure-JAX f32 reference mirroring the PyTorch forward semantics."""
    hp = jax.lax.Precision.HIGHEST
    x, h, c = x3[:, 0, :], h3[0], c3[0]
    dh = h.shape[-1]

    e_h = jnp.dot(h, p["wa_h"], precision=hp)
    e_e = jnp.einsum("bte,ed->btd", enc, p["wa_e"], precision=hp)
    energy = jnp.tanh(e_h[:, None, :] + e_e + p["ba"][None, :, :])
    scores = jnp.sum(energy * p["v"][None, :, :], axis=-1)
    a = jax.nn.softmax(scores, axis=1)
    weighted = jnp.einsum("bt,bte->be", a, enc, precision=hp)

    gates = (jnp.dot(x, p["wih_x"], precision=hp)
             + jnp.dot(weighted, p["wih_w"], precision=hp)
             + jnp.dot(h, p["whh"], precision=hp) + p["b_lstm"])
    i_g = jax.nn.sigmoid(gates[:, 0 * dh:1 * dh])
    f_g = jax.nn.sigmoid(gates[:, 1 * dh:2 * dh])
    g_g = jnp.tanh(gates[:, 2 * dh:3 * dh])
    o_g = jax.nn.sigmoid(gates[:, 3 * dh:4 * dh])
    c_new = f_g * c + i_g * g_g
    h_new = o_g * jnp.tanh(c_new)

    pred = (jnp.dot(h_new, p["wfc_h"], precision=hp)
            + jnp.dot(weighted, p["wfc_w"], precision=hp)
            + jnp.dot(x, p["wfc_x"], precision=hp) + p["b_fc"])
    return pred, h_new[None], c_new[None]


if __name__ == "__main__":
    bs, seq, input_size, enc_hid, dec_hid, out_size = 2, 8, 16, 32, 32, 24

    key = jax.random.PRNGKey(0)
    k1, k2, k3, k4, k5, kp = jax.random.split(key, 6)
    x3 = jax.random.normal(k1, (bs, 1, input_size), dtype=jnp.float32)   # `input`
    h3 = jax.random.normal(k2, (1, bs, dec_hid), dtype=jnp.float32)      # `hidden`
    c3 = jax.random.normal(k3, (1, bs, dec_hid), dtype=jnp.float32)      # `c`
    enc = jax.random.normal(k4, (bs, seq, enc_hid), dtype=jnp.float32)   # `encoder_outputs`

    params = init_params(kp, input_size, enc_hid, dec_hid, out_size)
    packed = pack_params(params, input_size, enc_hid, dec_hid, out_size)

    # bf16 MXU weights vs. f32 reference -> loosened tolerance.
    tol = dict(rtol=2e-2, atol=2e-2)

    # ---- single step: exact Seq2SeqDecoder.forward semantics ----------------
    pred, h_new, c_new = seq2seq_decoder_step(x3, h3, c3, enc, packed, out_size=out_size)
    jax.block_until_ready((pred, h_new, c_new))
    pred_r, h_r0, c_r0 = reference_step(x3, h3, c3, enc, params)
    assert pred.shape == (bs, out_size)
    assert h_new.shape == (1, bs, dec_hid) and c_new.shape == (1, bs, dec_hid)
    assert jnp.allclose(pred, pred_r, **tol)
    assert jnp.allclose(h_new, h_r0, **tol)
    assert jnp.allclose(c_new, c_r0, **tol)

    # ---- fused multi-step (teacher-forced) decode: ONE pallas_call ----------
    n_steps = 4
    x_seq = jax.random.normal(k5, (n_steps, bs, input_size), dtype=jnp.float32)
    preds, hT, cT = seq2seq_decoder_decode(x_seq, h3, c3, enc, packed, out_size=out_size)
    jax.block_until_ready((preds, hT, cT))

    h_r, c_r = h3, c3
    preds_r = []
    for t in range(n_steps):
        p_r, h_r, c_r = reference_step(x_seq[t][:, None, :], h_r, c_r, enc, params)
        preds_r.append(p_r)
    preds_r = jnp.stack(preds_r, axis=0)
    assert preds.shape == (n_steps, bs, out_size)
    assert jnp.allclose(preds, preds_r, **tol)
    assert jnp.allclose(hT, h_r, **tol)
    assert jnp.allclose(cT, c_r, **tol)

    print("KERNEL_OK")
</pallas_src>

<mosaic_0001>
module attributes {stable_mosaic.version = 11 : i64} {
  func.func @decoder_kernel(%arg0: i32, %arg1: memref<1x8x16xf32, #tpu.memory_space<vmem>>, %arg2: memref<8x32xf32, #tpu.memory_space<vmem>>, %arg3: memref<8x32xf32, #tpu.memory_space<vmem>>, %arg4: memref<8x8x32xf32, #tpu.memory_space<vmem>>, %arg5: memref<32x32xf32, #tpu.memory_space<vmem>>, %arg6: memref<32x32xf32, #tpu.memory_space<vmem>>, %arg7: memref<1x32xf32, #tpu.memory_space<vmem>>, %arg8: memref<1x32xf32, #tpu.memory_space<vmem>>, %arg9: memref<128x128xbf16, #tpu.memory_space<vmem>>, %arg10: memref<1x128xf32, #tpu.memory_space<vmem>>, %arg11: memref<128x128xbf16, #tpu.memory_space<vmem>>, %arg12: memref<1x128xf32, #tpu.memory_space<vmem>>, %arg13: memref<1x8x128xf32, #tpu.memory_space<vmem>>, %arg14: memref<8x32xf32, #tpu.memory_space<vmem>>, %arg15: memref<8x32xf32, #tpu.memory_space<vmem>>, %arg16: memref<8x32xf32, #tpu.memory_space<vmem>>, %arg17: memref<8x32xf32, #tpu.memory_space<vmem>>, %arg18: memref<8x8x32xf32, #tpu.memory_space<vmem>>, %arg19: memref<8x128xf32, #tpu.memory_space<vmem>>) attributes {dimension_semantics = [#tpu.dimension_semantics<arbitrary>], iteration_bounds = array<i64: 1>, scalar_prefetch = 0 : i64, scratch_operands = 4 : i64, tpu.core_type = #tpu.core_type<tc>, window_params = [{transform_indices = @transform_0, window_bounds = array<i64: 1, 8, 16>}, {pipeline_mode = #tpu.pipeline_mode<synchronous>, transform_indices = @transform_1, window_bounds = array<i64: 8, 32>}, {pipeline_mode = #tpu.pipeline_mode<synchronous>, transform_indices = @transform_2, window_bounds = array<i64: 8, 32>}, {pipeline_mode = #tpu.pipeline_mode<synchronous>, transform_indices = @transform_3, window_bounds = array<i64: 8, 8, 32>}, {pipeline_mode = #tpu.pipeline_mode<synchronous>, transform_indices = @transform_4, window_bounds = array<i64: 32, 32>}, {pipeline_mode = #tpu.pipeline_mode<synchronous>, transform_indices = @transform_5, window_bounds = array<i64: 32, 32>}, {pipeline_mode = #tpu.pipeline_mode<synchronous>, transform_indices = @transform_6, window_bounds = array<i64: 1, 32>}, {pipeline_mode = #tpu.pipeline_mode<synchronous>, transform_indices = @transform_7, window_bounds = array<i64: 1, 32>}, {pipeline_mode = #tpu.pipeline_mode<synchronous>, transform_indices = @transform_8, window_bounds = array<i64: 128, 128>}, {pipeline_mode = #tpu.pipeline_mode<synchronous>, transform_indices = @transform_9, window_bounds = array<i64: 1, 128>}, {pipeline_mode = #tpu.pipeline_mode<synchronous>, transform_indices = @transform_10, window_bounds = array<i64: 128, 128>}, {pipeline_mode = #tpu.pipeline_mode<synchronous>, transform_indices = @transform_11, window_bounds = array<i64: 1, 128>}, {transform_indices = @transform_12, window_bounds = array<i64: 1, 8, 128>}, {pipeline_mode = #tpu.pipeline_mode<synchronous>, transform_indices = @transform_13, window_bounds = array<i64: 8, 32>}, {pipeline_mode = #tpu.pipeline_mode<synchronous>, transform_indices = @transform_14, window_bounds = array<i64: 8, 32>}]} {
    %c0 = arith.constant 0 : index
    %c0_0 = arith.constant 0 : index
    %c0_1 = arith.constant 0 : index
    %0 = vector.load %arg4[%c0, %c0_0, %c0_1] : memref<8x8x32xf32, #tpu.memory_space<vmem>>, vector<8x8x32xf32>
    %c0_i32 = arith.constant 0 : i32
    %1 = arith.cmpi eq, %arg0, %c0_i32 : i32
    %2 = arith.extui %1 : i1 to i32
    %c0_i32_2 = arith.constant 0 : i32
    %3 = arith.cmpi ne, %2, %c0_i32_2 : i32
    scf.if %3 {
      %c0_55 = arith.constant 0 : index
      %c0_56 = arith.constant 0 : index
      %84 = vector.load %arg2[%c0_55, %c0_56] : memref<8x32xf32, #tpu.memory_space<vmem>>, vector<8x32xf32>
      %c0_57 = arith.constant 0 : index
      %c0_58 = arith.constant 0 : index
      %85 = vector.load %arg16[%c0_57, %c0_58] : memref<8x32xf32, #tpu.memory_space<vmem>>, vector<8x32xf32>
      tpu.vector_store %arg16[%c0_57, %c0_58], %84 {strides = array<i32>} : memref<8x32xf32, #tpu.memory_space<vmem>>, vector<8x32xf32>,
      %c0_59 = arith.constant 0 : index
      %c0_60 = arith.constant 0 : index
      %86 = vector.load %arg3[%c0_59, %c0_60] : memref<8x32xf32, #tpu.memory_space<vmem>>, vector<8x32xf32>
      %c0_61 = arith.constant 0 : index
      %c0_62 = arith.constant 0 : index
      %87 = vector.load %arg17[%c0_61, %c0_62] : memref<8x32xf32, #tpu.memory_space<vmem>>, vector<8x32xf32>
      tpu.vector_store %arg17[%c0_61, %c0_62], %86 {strides = array<i32>} : memref<8x32xf32, #tpu.memory_space<vmem>>, vector<8x32xf32>,
      %88 = vector.shape_cast %0 : vector<8x8x32xf32> to vector<64x32xf32>
      %c0_63 = arith.constant 0 : index
      %c0_64 = arith.constant 0 : index
      %89 = vector.load %arg6[%c0_63, %c0_64] : memref<32x32xf32, #tpu.memory_space<vmem>>, vector<32x32xf32>
      %cst_65 = arith.constant dense<0.000000e+00> : vector<64x32xf32>
      %90 = tpu.matmul %88, %89, %cst_65 {dimension_numbers = #tpu.dot_dimension_numbers<[1], [0], [0], [1], [0, 0, 1, 1], [], []>} : vector<64x32xf32>, vector<32x32xf32>, vector<64x32xf32> -> vector<64x32xf32>
      %91 = vector.shape_cast %90 : vector<64x32xf32> to vector<8x8x32xf32>
      %c0_66 = arith.constant 0 : index
      %c0_67 = arith.constant 0 : index
      %92 = vector.load %arg7[%c0_66, %c0_67] : memref<1x32xf32, #tpu.memory_space<vmem>>, vector<1x32xf32>
      %93 = vector.shape_cast %92 : vector<1x32xf32> to vector<1x1x32xf32>
      %94 = vector.broadcast %93 : vector<1x1x32xf32> to vector<8x8x32xf32>
      %95 = arith.addf %91, %94 : vector<8x8x32xf32>
      %c0_68 = arith.constant 0 : index
      %c0_69 = arith.constant 0 : index
      %c0_70 = arith.constant 0 : index
      %96 = vector.load %arg18[%c0_68, %c0_69, %c0_70] : memref<8x8x32xf32, #tpu.memory_space<vmem>>, vector<8x8x32xf32>
      tpu.vector_store %arg18[%c0_68, %c0_69, %c0_70], %95 {strides = array<i32>} : memref<8x8x32xf32, #tpu.memory_space<vmem>>, vector<8x8x32xf32>,
      %cst_71 = arith.constant 0.000000e+00 : f32
      %97 = vector.broadcast %cst_71 : f32 to vector<8x128xf32>
      %c0_72 = arith.constant 0 : index
      %c0_73 = arith.constant 0 : index
      %98 = vector.load %arg19[%c0_72, %c0_73] : memref<8x128xf32, #tpu.memory_space<vmem>>, vector<8x128xf32>
      tpu.vector_store %arg19[%c0_72, %c0_73], %97 {strides = array<i32>} : memref<8x128xf32, #tpu.memory_space<vmem>>, vector<8x128xf32>,
    } else {
    }
    %c0_3 = arith.constant 0 : index
    %c0_4 = arith.constant 0 : index
    %c0_5 = arith.constant 0 : index
    %4 = vector.load %arg1[%c0_3, %c0_4, %c0_5] : memref<1x8x16xf32, #tpu.memory_space<vmem>>, vector<1x8x16xf32>
    %5 = vector.shape_cast %4 : vector<1x8x16xf32> to vector<8x16xf32>
    %c0_6 = arith.constant 0 : index
    %c0_7 = arith.constant 0 : index
    %6 = vector.load %arg16[%c0_6, %c0_7] : memref<8x32xf32, #tpu.memory_space<vmem>>, vector<8x32xf32>
    %c0_8 = arith.constant 0 : index
    %c0_9 = arith.constant 0 : index
    %7 = vector.load %arg17[%c0_8, %c0_9] : memref<8x32xf32, #tpu.memory_space<vmem>>, vector<8x32xf32>
    %c0_10 = arith.constant 0 : index
    %c0_11 = arith.constant 0 : index
    %8 = vector.load %arg5[%c0_10, %c0_11] : memref<32x32xf32, #tpu.memory_space<vmem>>, vector<32x32xf32>
    %cst = arith.constant dense<0.000000e+00> : vector<8x32xf32>
    %9 = tpu.matmul %6, %8, %cst {dimension_numbers = #tpu.dot_dimension_numbers<[1], [0], [0], [1], [0, 0, 1, 1], [], []>} : vector<8x32xf32>, vector<32x32xf32>, vector<8x32xf32> -> vector<8x32xf32>
    %10 = vector.shape_cast %9 : vector<8x32xf32> to vector<8x1x32xf32>
    %c0_12 = arith.constant 0 : index
    %c0_13 = arith.constant 0 : index
    %c0_14 = arith.constant 0 : index
    %11 = vector.load %arg18[%c0_12, %c0_13, %c0_14] : memref<8x8x32xf32, #tpu.memory_space<vmem>>, vector<8x8x32xf32>
    %12 = vector.broadcast %10 : vector<8x1x32xf32> to vector<8x8x32xf32>
    %13 = arith.addf %12, %11 : vector<8x8x32xf32>
    %14 = math.tanh %13 : vector<8x8x32xf32>
    %c0_15 = arith.constant 0 : index
    %c0_16 = arith.constant 0 : index
    %15 = vector.load %arg8[%c0_15, %c0_16] : memref<1x32xf32, #tpu.memory_space<vmem>>, vector<1x32xf32>
    %16 = vector.shape_cast %15 : vector<1x32xf32> to vector<1x1x32xf32>
    %17 = vector.broadcast %16 : vector<1x1x32xf32> to vector<8x8x32xf32>
    %18 = arith.mulf %14, %17 : vector<8x8x32xf32>
    %cst_17 = arith.constant dense<0.000000e+00> : vector<8x8xf32>
    %19 = vector.multi_reduction <add>, %18, %cst_17 [2] : vector<8x8x32xf32> to vector<8x8xf32>
    %cst_18 = arith.constant dense<0xFF800000> : vector<8xf32>
    %20 = vector.multi_reduction <maximumf>, %19, %cst_18 [1] : vector<8x8xf32> to vector<8xf32>
    %21 = vector.shape_cast %20 : vector<8xf32> to vector<8x1xf32>
    %22 = vector.broadcast %21 : vector<8x1xf32> to vector<8x8xf32>
    %23 = arith.subf %19, %22 : vector<8x8xf32>
    %24 = math.exp %23 : vector<8x8xf32>
    %cst_19 = arith.constant dense<0.000000e+00> : vector<8xf32>
    %25 = vector.multi_reduction <add>, %24, %cst_19 [1] : vector<8x8xf32> to vector<8xf32>
    %26 = vector.shape_cast %25 : vector<8xf32> to vector<8x1xf32>
    %27 = tpu.reciprocal %26 {approx = true} : vector<8x1xf32> -> vector<8x1xf32>
    %28 = vector.broadcast %27 : vector<8x1xf32> to vector<8x8xf32>
    %29 = arith.mulf %24, %28 : vector<8x8xf32>
    %30 = vector.shape_cast %29 : vector<8x8xf32> to vector<8x8x1xf32>
    %31 = vector.broadcast %30 : vector<8x8x1xf32> to vector<8x8x32xf32>
    %32 = arith.mulf %31, %0 : vector<8x8x32xf32>
    %cst_20 = arith.constant dense<0.000000e+00> : vector<8x32xf32>
    %33 = vector.multi_reduction <add>, %32, %cst_20 [1] : vector<8x8x32xf32> to vector<8x32xf32>
    %c0_21 = arith.constant 0 : index
    %c0_22 = arith.constant 0 : index
    %34 = vector.load %arg19[%c0_21, %c0_22] : memref<8x128xf32, #tpu.memory_space<vmem>>, vector<8x16xf32>
    tpu.vector_store %arg19[%c0_21, %c0_22], %5 {strides = array<i32>} : memref<8x128xf32, #tpu.memory_space<vmem>>, vector<8x16xf32>,
    %c0_23 = arith.constant 0 : index
    %c16 = arith.constant 16 : index
    %35 = vector.load %arg19[%c0_23, %c16] : memref<8x128xf32, #tpu.memory_space<vmem>>, vector<8x32xf32>
    tpu.vector_store %arg19[%c0_23, %c16], %33 {strides = array<i32>} : memref<8x128xf32, #tpu.memory_space<vmem>>, vector<8x32xf32>,
    %c0_24 = arith.constant 0 : index
    %c48 = arith.constant 48 : index
    %36 = vector.load %arg19[%c0_24, %c48] : memref<8x128xf32, #tpu.memory_space<vmem>>, vector<8x32xf32>
    tpu.vector_store %arg19[%c0_24, %c48], %6 {strides = array<i32>} : memref<8x128xf32, #tpu.memory_space<vmem>>, vector<8x32xf32>,
    %c0_25 = arith.constant 0 : index
    %c0_26 = arith.constant 0 : index
    %37 = vector.load %arg19[%c0_25, %c0_26] : memref<8x128xf32, #tpu.memory_space<vmem>>, vector<8x128xf32>
    %38 = arith.truncf %37 : vector<8x128xf32> to vector<8x128xbf16>
    %c0_27 = arith.constant 0 : index
    %c0_28 = arith.constant 0 : index
    %39 = vector.load %arg9[%c0_27, %c0_28] : memref<128x128xbf16, #tpu.memory_space<vmem>>, vector<128x128xbf16>
    %cst_29 = arith.constant dense<0.000000e+00> : vector<8x128xf32>
    %40 = tpu.matmul %38, %39, %cst_29 {dimension_numbers = #tpu.dot_dimension_numbers<[1], [0], [0], [1], [0, 0, 1, 1], [], []>} : vector<8x128xbf16>, vector<128x128xbf16>, vector<8x128xf32> -> vector<8x128xf32>
    %c0_30 = arith.constant 0 : index
    %c0_31 = arith.constant 0 : index
    %41 = vector.load %arg10[%c0_30, %c0_31] : memref<1x128xf32, #tpu.memory_space<vmem>>, vector<1x128xf32>
    %42 = vector.broadcast %41 : vector<1x128xf32> to vector<8x128xf32>
    %43 = arith.addf %40, %42 : vector<8x128xf32>
    %44 = vector.extract_strided_slice %43 {offsets = [0, 0], sizes = [8, 32], strides = [1, 1]} : vector<8x128xf32> to vector<8x32xf32>
    %45 = arith.negf %44 : vector<8x32xf32>
    %46 = math.exp %45 : vector<8x32xf32>
    %cst_32 = arith.constant 1.000000e+00 : f32
    %47 = vector.broadcast %cst_32 : f32 to vector<8x32xf32>
    %48 = arith.addf %47, %46 : vector<8x32xf32>
    %49 = arith.divf %47, %48 : vector<8x32xf32>
    %50 = vector.extract_strided_slice %43 {offsets = [0, 32], sizes = [8, 32], strides = [1, 1]} : vector<8x128xf32> to vector<8x32xf32>
    %51 = arith.negf %50 : vector<8x32xf32>
    %52 = math.exp %51 : vector<8x32xf32>
    %cst_33 = arith.constant 1.000000e+00 : f32
    %53 = vector.broadcast %cst_33 : f32 to vector<8x32xf32>
    %54 = arith.addf %53, %52 : vector<8x32xf32>
    %55 = arith.divf %53, %54 : vector<8x32xf32>
    %56 = vector.extract_strided_slice %43 {offsets = [0, 64], sizes = [8, 32], strides = [1, 1]} : vector<8x128xf32> to vector<8x32xf32>
    %57 = math.tanh %56 : vector<8x32xf32>
    %58 = vector.extract_strided_slice %43 {offsets = [0, 96], sizes = [8, 32], strides = [1, 1]} : vector<8x128xf32> to vector<8x32xf32>
    %59 = arith.negf %58 : vector<8x32xf32>
    %60 = math.exp %59 : vector<8x32xf32>
    %cst_34 = arith.constant 1.000000e+00 : f32
    %61 = vector.broadcast %cst_34 : f32 to vector<8x32xf32>
    %62 = arith.addf %61, %60 : vector<8x32xf32>
    %63 = arith.divf %61, %62 : vector<8x32xf32>
    %64 = arith.mulf %55, %7 : vector<8x32xf32>
    %65 = arith.mulf %49, %57 : vector<8x32xf32>
    %66 = arith.addf %64, %65 : vector<8x32xf32>
    %67 = math.tanh %66 : vector<8x32xf32>
    %68 = arith.mulf %63, %67 : vector<8x32xf32>
    %c0_35 = arith.constant 0 : index
    %c48_36 = arith.constant 48 : index
    %69 = vector.load %arg19[%c0_35, %c48_36] : memref<8x128xf32, #tpu.memory_space<vmem>>, vector<8x32xf32>
    tpu.vector_store %arg19[%c0_35, %c48_36], %68 {strides = array<i32>} : memref<8x128xf32, #tpu.memory_space<vmem>>, vector<8x32xf32>,
    %c0_37 = arith.constant 0 : index
    %c0_38 = arith.constant 0 : index
    %70 = vector.load %arg19[%c0_37, %c0_38] : memref<8x128xf32, #tpu.memory_space<vmem>>, vector<8x128xf32>
    %71 = arith.truncf %70 : vector<8x128xf32> to vector<8x128xbf16>
    %c0_39 = arith.constant 0 : index
    %c0_40 = arith.constant 0 : index
    %72 = vector.load %arg11[%c0_39, %c0_40] : memref<128x128xbf16, #tpu.memory_space<vmem>>, vector<128x128xbf16>
    %cst_41 = arith.constant dense<0.000000e+00> : vector<8x128xf32>
    %73 = tpu.matmul %71, %72, %cst_41 {dimension_numbers = #tpu.dot_dimension_numbers<[1], [0], [0], [1], [0, 0, 1, 1], [], []>} : vector<8x128xbf16>, vector<128x128xbf16>, vector<8x128xf32> -> vector<8x128xf32>
    %c0_42 = arith.constant 0 : index
    %c0_43 = arith.constant 0 : index
    %74 = vector.load %arg12[%c0_42, %c0_43] : memref<1x128xf32, #tpu.memory_space<vmem>>, vector<1x128xf32>
    %75 = vector.broadcast %74 : vector<1x128xf32> to vector<8x128xf32>
    %76 = arith.addf %73, %75 : vector<8x128xf32>
    %c0_44 = arith.constant 0 : index
    %c0_45 = arith.constant 0 : index
    %c0_46 = arith.constant 0 : index
    %77 = vector.load %arg13[%c0_44, %c0_45, %c0_46] : memref<1x8x128xf32, #tpu.memory_space<vmem>>, vector<1x8x128xf32>
    %78 = vector.shape_cast %77 : vector<1x8x128xf32> to vector<8x128xf32>
    %79 = vector.shape_cast %76 : vector<8x128xf32> to vector<1x8x128xf32>
    tpu.vector_store %arg13[%c0_44, %c0_45, %c0_46], %79 {strides = array<i32>} : memref<1x8x128xf32, #tpu.memory_space<vmem>>, vector<1x8x128xf32>,
    %c0_47 = arith.constant 0 : index
    %c0_48 = arith.constant 0 : index
    %80 = vector.load %arg16[%c0_47, %c0_48] : memref<8x32xf32, #tpu.memory_space<vmem>>, vector<8x32xf32>
    tpu.vector_store %arg16[%c0_47, %c0_48], %68 {strides = array<i32>} : memref<8x32xf32, #tpu.memory_space<vmem>>, vector<8x32xf32>,
    %c0_49 = arith.constant 0 : index
    %c0_50 = arith.constant 0 : index
    %81 = vector.load %arg17[%c0_49, %c0_50] : memref<8x32xf32, #tpu.memory_space<vmem>>, vector<8x32xf32>
    tpu.vector_store %arg17[%c0_49, %c0_50], %66 {strides = array<i32>} : memref<8x32xf32, #tpu.memory_space<vmem>>, vector<8x32xf32>,
    %c0_51 = arith.constant 0 : index
    %c0_52 = arith.constant 0 : index
    %82 = vector.load %arg14[%c0_51, %c0_52] : memref<8x32xf32, #tpu.memory_space<vmem>>, vector<8x32xf32>
    tpu.vector_store %arg14[%c0_51, %c0_52], %68 {strides = array<i32>} : memref<8x32xf32, #tpu.memory_space<vmem>>, vector<8x32xf32>,
    %c0_53 = arith.constant 0 : index
    %c0_54 = arith.constant 0 : index
    %83 = vector.load %arg15[%c0_53, %c0_54] : memref<8x32xf32, #tpu.memory_space<vmem>>, vector<8x32xf32>
    tpu.vector_store %arg15[%c0_53, %c0_54], %66 {strides = array<i32>} : memref<8x32xf32, #tpu.memory_space<vmem>>, vector<8x32xf32>,
    return
  }
  func.func @transform_0(%arg0: i32) -> (i32, i32, i32) {
    %c0_i32 = arith.constant 0 : i32
    %c0_i32_0 = arith.constant 0 : i32
    %c0_i32_1 = arith.constant 0 : i32
    return %arg0, %c0_i32, %c0_i32_0 : i32, i32, i32
  }
  func.func @transform_1(%arg0: i32) -> (i32, i32) {
    %c0_i32 = arith.constant 0 : i32
    %c0_i32_0 = arith.constant 0 : i32
    %c0_i32_1 = arith.constant 0 : i32
    return %c0_i32, %c0_i32_0 : i32, i32
  }
  func.func @transform_2(%arg0: i32) -> (i32, i32) {
    %c0_i32 = arith.constant 0 : i32
    %c0_i32_0 = arith.constant 0 : i32
    %c0_i32_1 = arith.constant 0 : i32
    return %c0_i32, %c0_i32_0 : i32, i32
  }
  func.func @transform_3(%arg0: i32) -> (i32, i32, i32) {
    %c0_i32 = arith.constant 0 : i32
    %c0_i32_0 = arith.constant 0 : i32
    %c0_i32_1 = arith.constant 0 : i32
    %c0_i32_2 = arith.constant 0 : i32
    return %c0_i32, %c0_i32_0, %c0_i32_1 : i32, i32, i32
  }
  func.func @transform_4(%arg0: i32) -> (i32, i32) {
    %c0_i32 = arith.constant 0 : i32
    %c0_i32_0 = arith.constant 0 : i32
    %c0_i32_1 = arith.constant 0 : i32
    return %c0_i32, %c0_i32_0 : i32, i32
  }
  func.func @transform_5(%arg0: i32) -> (i32, i32) {
    %c0_i32 = arith.constant 0 : i32
    %c0_i32_0 = arith.constant 0 : i32
    %c0_i32_1 = arith.constant 0 : i32
    return %c0_i32, %c0_i32_0 : i32, i32
  }
  func.func @transform_6(%arg0: i32) -> (i32, i32) {
    %c0_i32 = arith.constant 0 : i32
    %c0_i32_0 = arith.constant 0 : i32
    %c0_i32_1 = arith.constant 0 : i32
    return %c0_i32, %c0_i32_0 : i32, i32
  }
  func.func @transform_7(%arg0: i32) -> (i32, i32) {
    %c0_i32 = arith.constant 0 : i32
    %c0_i32_0 = arith.constant 0 : i32
    %c0_i32_1 = arith.constant 0 : i32
    return %c0_i32, %c0_i32_0 : i32, i32
  }
  func.func @transform_8(%arg0: i32) -> (i32, i32) {
    %c0_i32 = arith.constant 0 : i32
    %c0_i32_0 = arith.constant 0 : i32
    %c0_i32_1 = arith.constant 0 : i32
    return %c0_i32, %c0_i32_0 : i32, i32
  }
  func.func @transform_9(%arg0: i32) -> (i32, i32) {
    %c0_i32 = arith.constant 0 : i32
    %c0_i32_0 = arith.constant 0 : i32
    %c0_i32_1 = arith.constant 0 : i32
    return %c0_i32, %c0_i32_0 : i32, i32
  }
  func.func @transform_10(%arg0: i32) -> (i32, i32) {
    %c0_i32 = arith.constant 0 : i32
    %c0_i32_0 = arith.constant 0 : i32
    %c0_i32_1 = arith.constant 0 : i32
    return %c0_i32, %c0_i32_0 : i32, i32
  }
  func.func @transform_11(%arg0: i32) -> (i32, i32) {
    %c0_i32 = arith.constant 0 : i32
    %c0_i32_0 = arith.constant 0 : i32
    %c0_i32_1 = arith.constant 0 : i32
    return %c0_i32, %c0_i32_0 : i32, i32
  }
  func.func @transform_12(%arg0: i32) -> (i32, i32, i32) {
    %c0_i32 = arith.constant 0 : i32
    %c0_i32_0 = arith.constant 0 : i32
    %c0_i32_1 = arith.constant 0 : i32
    return %arg0, %c0_i32, %c0_i32_0 : i32, i32, i32
  }
  func.func @transform_13(%arg0: i32) -> (i32, i32) {
    %c0_i32 = arith.constant 0 : i32
    %c0_i32_0 = arith.constant 0 : i32
    %c0_i32_1 = arith.constant 0 : i32
    return %c0_i32, %c0_i32_0 : i32, i32
  }
  func.func @transform_14(%arg0: i32) -> (i32, i32) {
    %c0_i32 = arith.constant 0 : i32
    %c0_i32_0 = arith.constant 0 : i32
    %c0_i32_1 = arith.constant 0 : i32
    return %c0_i32, %c0_i32_0 : i32, i32
  }
}

</mosaic_0001>

<llo_original>
// kernel: seq2seq_decoder_decode.1
$region0: #{seq2seq_decoder_decode.1}
  #allocation0 [shape = 'u32[]', space=smem, size = 0x4, offset = 0x4, fixed_abs, tag = 'smem constant byte address 0x4 - core index']
  #allocation1 [shape = 'u32[144,128]{1,0:T(1,128)}', space=vmem, size = 0x12000, scoped, tag = 'internal scratch']
  #allocation2 [shape = 'f32[8,32]{1,0:T(8,128)}', space=vmem, size = 0x1000, scoped, tag = 'scratch operand']
  #allocation3 [shape = 'f32[8,32]{1,0:T(8,128)}', space=vmem, size = 0x1000, scoped, tag = 'scratch operand']
  #allocation4 [shape = 'f32[8,8,32]{2,1,0:T(8,128)}', space=vmem, size = 0x8000, scoped, tag = 'scratch operand']
  #allocation5 [shape = 'f32[8,128]{1,0:T(8,128)}', space=vmem, size = 0x1000, scoped, tag = 'scratch operand']
  %s0 = inlined_call_operand.vmem [shape: f32[1,8,16], index: 0, kind: input, shape index: {}]
  %s1 = inlined_call_operand.vmem [shape: f32[8,32], index: 1, kind: input, shape index: {}, may-alias: {1,13}]
  %s2 = inlined_call_operand.vmem [shape: f32[8,32], index: 2, kind: input, shape index: {}, may-alias: {2,14}]
  %s3 = inlined_call_operand.vmem [shape: f32[8,8,32], index: 3, kind: input, shape index: {}]
  %s4 = inlined_call_operand.vmem [shape: f32[32,32], index: 4, kind: input, shape index: {}]
  %s5 = inlined_call_operand.hbm [shape: f32[32,32], index: 5, kind: input, shape index: {}]
  %s6 = inlined_call_operand.vmem [shape: f32[1,32], index: 6, kind: input, shape index: {}]
  %s7 = inlined_call_operand.vmem [shape: f32[1,32], index: 7, kind: input, shape index: {}]
  %s8 = inlined_call_operand.vmem [shape: bf16[128,128], index: 8, kind: input, shape index: {}]
  %s9 = inlined_call_operand.vmem [shape: f32[1,128], index: 9, kind: input, shape index: {}]
  %s10 = inlined_call_operand.vmem [shape: bf16[128,128], index: 10, kind: input, shape index: {}]
  %s11 = inlined_call_operand.hbm [shape: f32[1,128], index: 11, kind: input, shape index: {}]
  %s12 = inlined_call_operand.vmem [shape: f32[1,8,128], index: 12, kind: output, shape index: {0}]
  %s13 = inlined_call_operand.vmem [shape: f32[8,32], index: 13, kind: output, shape index: {1}, may-alias: {1,13}]
  %s14 = inlined_call_operand.vmem [shape: f32[8,32], index: 14, kind: output, shape index: {2}, may-alias: {2,14}]
  %15 = xla_tuple %s12, %s13, %s14
  %s16 = sld [smem:[#allocation0]]
  $region86: #{seq2seq_decoder_decode.1} parent=0
    _
  %s18 = ssub.s32 1, %s16
  %s19 = scalar_select 0, %s18, %s16
  $region1: #{seq2seq_decoder_decode.1} parent=0
    #allocation6 [shape = 'u8[16384]{0}', space=vmem, size = 0x4000, scoped, tag = 'input window, operand 5, single buffered']
    #allocation7 [shape = 's32[1]{0}', space=sflag, size = 0x4, scoped, tag = 'scoped memory for seq2seq_decoder_decode.1']
    #allocation8 [shape = 'u8[512]{0}', space=vmem, size = 0x400, scoped, tag = 'input window, operand 11, single buffered']
    #allocation9 [shape = 's32[1]{0}', space=sflag, size = 0x4, scoped, tag = 'scoped memory for seq2seq_decoder_decode.1']
    %20 = vsyncpa [#allocation7], 0
    %21 = vsyncpa [#allocation9], 0
    // Predicated region
    $region2: #{seq2seq_decoder_decode.1} parent=1 // pred_check
      _
    $region3: #{seq2seq_decoder_decode.1} parent=1 // pred_check_branch
      %23 = sbr.rel (0) target = $region5
    $region4: #{seq2seq_decoder_decode.1} parent=1 // pred_region
      _
    $region5: #{seq2seq_decoder_decode.1} parent=1 // pred_fallthru
      _
    // Predicated region
    $region6: #{seq2seq_decoder_decode.1} parent=1 // pred_check
      _
    $region7: #{seq2seq_decoder_decode.1} parent=1 // pred_check_branch
      %25 = sbr.rel (0) target = $region9
    $region8: #{seq2seq_decoder_decode.1} parent=1 // pred_region
      _
    $region9: #{seq2seq_decoder_decode.1} parent=1 // pred_fallthru
      _
    // Predicated region
    $region10: #{seq2seq_decoder_decode.1} parent=1 // pred_check
      _
    $region11: #{seq2seq_decoder_decode.1} parent=1 // pred_check_branch
      %27 = sbr.rel (0) target = $region13
    $region12: #{seq2seq_decoder_decode.1} parent=1 // pred_region
      _
    $region13: #{seq2seq_decoder_decode.1} parent=1 // pred_fallthru
      _
    // Predicated region
    $region14: #{seq2seq_decoder_decode.1} parent=1 // pred_check
      _
    $region15: #{seq2seq_decoder_decode.1} parent=1 // pred_check_branch
      %29 = sbr.rel (0) target = $region17
    $region16: #{seq2seq_decoder_decode.1} parent=1 // pred_region
      _
    $region17: #{seq2seq_decoder_decode.1} parent=1 // pred_fallthru
      _
    // Predicated region
    $region18: #{seq2seq_decoder_decode.1} parent=1 // pred_check
      _
    $region19: #{seq2seq_decoder_decode.1} parent=1 // pred_check_branch
      %31 = sbr.rel (0) target = $region21
    $region20: #{seq2seq_decoder_decode.1} parent=1 // pred_region
      _
    $region21: #{seq2seq_decoder_decode.1} parent=1 // pred_fallthru
      _
    // Predicated region
    $region22: #{seq2seq_decoder_decode.1} parent=1 // pred_check
      _
    $region23: #{seq2seq_decoder_decode.1} parent=1 // pred_check_branch
      %33 = sbr.rel (0) target = $region25
    $region24: #{seq2seq_decoder_decode.1} parent=1 // pred_region
      %s35 = ssub.s32 512, 512
      %36 = vsyncadd [#allocation7], %s35
      %s37 = sshll.u32 [#allocation6], 4
      %s38 = int_to_ptr.vmem [resolvable:$true] %s37
      %43 = dma.hbm_to_vmem [thread:$0]  %s5, 512, %s38, [#allocation7], 128, 128, 8
    $region25: #{seq2seq_decoder_decode.1} parent=1 // pred_fallthru
      _
    // Predicated region
    $region26: #{seq2seq_decoder_decode.1} parent=1 // pred_check
      _
    $region27: #{seq2seq_decoder_decode.1} parent=1 // pred_check_branch
      %45 = sbr.rel (0) target = $region29
    $region28: #{seq2seq_decoder_decode.1} parent=1 // pred_region
      _
    $region29: #{seq2seq_decoder_decode.1} parent=1 // pred_fallthru
      _
    // Predicated region
    $region30: #{seq2seq_decoder_decode.1} parent=1 // pred_check
      _
    $region31: #{seq2seq_decoder_decode.1} parent=1 // pred_check_branch
      %47 = sbr.rel (0) target = $region33
    $region32: #{seq2seq_decoder_decode.1} parent=1 // pred_region
      _
    $region33: #{seq2seq_decoder_decode.1} parent=1 // pred_fallthru
      _
    // Predicated region
    $region34: #{seq2seq_decoder_decode.1} parent=1 // pred_check
      _
    $region35: #{seq2seq_decoder_decode.1} parent=1 // pred_check_branch
      %49 = sbr.rel (0) target = $region37
    $region36: #{seq2seq_decoder_decode.1} parent=1 // pred_region
      _
    $region37: #{seq2seq_decoder_decode.1} parent=1 // pred_fallthru
      _
    // Predicated region
    $region38: #{seq2seq_decoder_decode.1} parent=1 // pred_check
      _
    $region39: #{seq2seq_decoder_decode.1} parent=1 // pred_check_branch
      %51 = sbr.rel (0) target = $region41
    $region40: #{seq2seq_decoder_decode.1} parent=1 // pred_region
      _
    $region41: #{seq2seq_decoder_decode.1} parent=1 // pred_fallthru
      _
    // Predicated region
    $region42: #{seq2seq_decoder_decode.1} parent=1 // pred_check
      _
    $region43: #{seq2seq_decoder_decode.1} parent=1 // pred_check_branch
      %53 = sbr.rel (0) target = $region45
    $region44: #{seq2seq_decoder_decode.1} parent=1 // pred_region
      _
    $region45: #{seq2seq_decoder_decode.1} parent=1 // pred_fallthru
      _
    // Predicated region
    $region46: #{seq2seq_decoder_decode.1} parent=1 // pred_check
      _
    $region47: #{seq2seq_decoder_decode.1} parent=1 // pred_check_branch
      %55 = sbr.rel (0) target = $region49
    $region48: #{seq2seq_decoder_decode.1} parent=1 // pred_region
      %s57 = ssub.s32 16, 16
      %58 = vsyncadd [#allocation9], %s57
      %s60 = sshll.u32 [#allocation8], 4
      %s61 = int_to_ptr.vmem [resolvable:$true] %s60
      %63 = dma.hbm_to_vmem [thread:$0]  %s11, 16, %s61, [#allocation9]
    $region49: #{seq2seq_decoder_decode.1} parent=1 // pred_fallthru
      _
    // Predicated region
    $region50: #{seq2seq_decoder_decode.1} parent=1 // pred_check
      _
    $region51: #{seq2seq_decoder_decode.1} parent=1 // pred_check_branch
      %65 = sbr.rel (0) target = $region53
    $region52: #{seq2seq_decoder_decode.1} parent=1 // pred_region
      %66 = dma.done [#allocation7], 512
    $region53: #{seq2seq_decoder_decode.1} parent=1 // pred_fallthru
      _
    // Predicated region
    $region54: #{seq2seq_decoder_decode.1} parent=1 // pred_check
      _
    $region55: #{seq2seq_decoder_decode.1} parent=1 // pred_check_branch
      %68 = sbr.rel (0) target = $region57
    $region56: #{seq2seq_decoder_decode.1} parent=1 // pred_region
      %69 = dma.done [#allocation9], 16
    $region57: #{seq2seq_decoder_decode.1} parent=1 // pred_fallthru
      _
    %v71 = vld [vmem:[%s3] sm:$0xff]
    %v72 = vld [vmem:[%s3 + $0x8] sm:$0xff]
    %v73 = vld [vmem:[%s3 + $0x10] sm:$0xff]
    %v74 = vld [vmem:[%s3 + $0x18] sm:$0xff]
    %v75 = vld [vmem:[%s3 + $0x20] sm:$0xff]
    %v76 = vld [vmem:[%s3 + $0x28] sm:$0xff]
    %v77 = vld [vmem:[%s3 + $0x30] sm:$0xff]
    %v78 = vld [vmem:[%s3 + $0x38] sm:$0xff]
    %p79 = scmp.eq.s32.totalorder 0, 0
    // Predicated region
    $region58: #{seq2seq_decoder_decode.1} parent=1 // pred_check
      %p80 = pneg %p79
    $region59: #{seq2seq_decoder_decode.1} parent=1 // pred_check_branch
      %82 = sbr.rel (%p80) target = $region61
    $region60: #{seq2seq_decoder_decode.1} parent=1 // pred_region
      %v83 = vld [vmem:[%s1] sm:$0xff]
      %vm84 = vcmask 261120
      %85 = vst.msk [vmem:[#allocation2] sm:$0xff] %vm84, %v83
      %v86 = vld [vmem:[%s2] sm:$0xff]
      %87 = vst.msk [vmem:[#allocation3] sm:$0xff] %vm84, %v86
      %v88 = vld [vmem:[#allocation6] sm:$0xff]
      %v89 = vld [vmem:[#allocation6 + $0x8] sm:$0xff]
      %v90 = vld [vmem:[#allocation6 + $0x10] sm:$0xff]
      %v91 = vld [vmem:[#allocation6 + $0x18] sm:$0xff]
      %v93 = vsel %vm84, %v71, 0
      %v96 = vsel %vm84, %v72, 0
      %v99 = vsel %vm84, %v73, 0
      %v102 = vsel %vm84, %v74, 0
      %v105 = vsel %vm84, %v75, 0
      %v108 = vsel %vm84, %v76, 0
      %v111 = vsel %vm84, %v77, 0
      %v114 = vsel %vm84, %v78, 0
      %116 = vmatprep.subr.mxu0 0.0
      %117 = vmatpush1.msra.mxu0 %v88
      %118 = vmatprep.subr.mxu0 0.0
      %119 = vmatpush1.msra.mxu0 %v89
      %120 = vmatprep.subr.mxu0 0.0
      %121 = vmatpush1.msra.mxu0 %v90
      %122 = vmatprep.subr.mxu0 0.0
      %123 = vmatpush1.msra.mxu0 %v91
      %124 = vmatprep.subr.mxu0 0.0
      %125 = vmatpush1.msra.mxu0 0.0
      %126 = vmatprep.subr.mxu0 0.0
      %127 = vmatpush1.msra.mxu0 0.0
      %128 = vmatprep.subr.mxu0 0.0
      %129 = vmatpush1.msra.mxu0 0.0
      %130 = vmatprep.subr.mxu0 0.0
      %131 = vmatpush1.msra.mxu0 0.0
      %132 = vmatprep.subr.mxu0 0.0
      %133 = vmatpush1.msra.mxu0 0.0
      %134 = vmatprep.subr.mxu0 0.0
      %135 = vmatpush1.msra.mxu0 0.0
      %136 = vmatprep.subr.mxu0 0.0
      %137 = vmatpush1.msra.mxu0 0.0
      %138 = vmatprep.subr.mxu0 0.0
      %139 = vmatpush1.msra.mxu0 0.0
      %140 = vmatprep.subr.mxu0 0.0
      %141 = vmatpush1.msra.mxu0 0.0
      %142 = vmatprep.subr.mxu0 0.0
      %143 = vmatpush1.msra.mxu0 0.0
      %144 = vmatprep.subr.mxu0 0.0
      %145 = vmatpush1.msra.mxu0 0.0
      %146 = vmatprep.subr.mxu0 0.0
      %147 = vmatpush1.msra.mxu0 0.0
      %148 = vmatprep.subr.mxu0 0.0
      %149 = vmatpush1.msra.mxu0 0.0
      %150 = vmatprep.subr.mxu0 0.0
      %151 = vmatpush1.msra.mxu0 0.0
      %152 = vmatprep.subr.mxu0 0.0
      %153 = vmatpush1.msra.mxu0 0.0
      %154 = vmatprep.subr.mxu0 0.0
      %155 = vmatpush1.msra.mxu0 0.0
      %156 = vmatprep.subr.mxu0 0.0
      %157 = vmatpush1.msra.mxu0 0.0
      %158 = vmatprep.subr.mxu0 0.0
      %159 = vmatpush1.msra.mxu0 0.0
      %160 = vmatprep.subr.mxu0 0.0
      %161 = vmatpush1.msra.mxu0 0.0
      %162 = vmatprep.subr.mxu0 0.0
      %163 = vmatpush1.msra.mxu0 0.0
      %164 = vmatprep.subr.mxu0 0.0
      %165 = vmatpush1.msra.mxu0 0.0
      %166 = vmatprep.subr.mxu0 0.0
      %167 = vmatpush1.msra.mxu0 0.0
      %168 = vmatprep.subr.mxu0 0.0
      %169 = vmatpush1.msra.mxu0 0.0
      %170 = vmatprep.subr.mxu0 0.0
      %171 = vmatpush1.msra.mxu0 0.0
      %172 = vmatprep.subr.mxu0 0.0
      %173 = vmatpush1.msra.mxu0 0.0
      %174 = vmatprep.subr.mxu0 0.0
      %175 = vmatpush1.msra.mxu0 0.0
      %176 = vmatprep.subr.mxu0 0.0
      %177 = vmatpush1.msra.mxu0 0.0
      %178 = vmatprep.subr.mxu0 0.0
      %179 = vmatpush1.msra.mxu0 0.0
      %180 = vmatprep.mubr.f32.mxu0 0.0
      %181 = vmatmul.mubr.f32.gmra.mrb[0].mxu0 %v93
      %v182 = vpop.f32.mrb[0].mxu0
      %v183 = vadd.f32 0.0, %v182
      %v184 = vpop.f32.mrb[0].mxu0
      %185 = vmatprep.mubr.f32.mxu0 0.0
      %186 = vmatmul.mubr.f32.gmra.mrb[0].mxu0 %v96
      %v187 = vpop.f32.mrb[0].mxu0
      %v188 = vadd.f32 0.0, %v187
      %v189 = vpop.f32.mrb[0].mxu0
      %190 = vmatprep.mubr.f32.mxu0 0.0
      %191 = vmatmul.mubr.f32.gmra.mrb[0].mxu0 %v99
      %v192 = vpop.f32.mrb[0].mxu0
      %v193 = vadd.f32 0.0, %v192
      %v194 = vpop.f32.mrb[0].mxu0
      %195 = vmatprep.mubr.f32.mxu0 0.0
      %196 = vmatmul.mubr.f32.gmra.mrb[0].mxu0 %v102
      %v197 = vpop.f32.mrb[0].mxu0
      %v198 = vadd.f32 0.0, %v197
      %v199 = vpop.f32.mrb[0].mxu0
      %200 = vmatprep.mubr.f32.mxu0 0.0
      %201 = vmatmul.mubr.f32.gmra.mrb[0].mxu0 %v105
      %v202 = vpop.f32.mrb[0].mxu0
      %v203 = vadd.f32 0.0, %v202
      %v204 = vpop.f32.mrb[0].mxu0
      %205 = vmatprep.mubr.f32.mxu0 0.0
      %206 = vmatmul.mubr.f32.gmra.mrb[0].mxu0 %v108
      %v207 = vpop.f32.mrb[0].mxu0
      %v208 = vadd.f32 0.0, %v207
      %v209 = vpop.f32.mrb[0].mxu0
      %210 = vmatprep.mubr.f32.mxu0 0.0
      %211 = vmatmul.mubr.f32.gmra.mrb[0].mxu0 %v111
      %v212 = vpop.f32.mrb[0].mxu0
      %v213 = vadd.f32 0.0, %v212
      %v214 = vpop.f32.mrb[0].mxu0
      %215 = vmatprep.mubr.f32.mxu0 0.0
      %216 = vmatmul.mubr.f32.gmra.mrb[0].mxu0 %v114
      %v217 = vpop.f32.mrb[0].mxu0
      %v218 = vadd.f32 0.0, %v217
      %v219 = vpop.f32.mrb[0].mxu0
      %220 = vdwg.mxu0
      %v221 = vld [vmem:[%s6] sm:$0x1]
      %v223 = vlaneseq
      %v224 = vshrl.u32 %v223, 7
      %v225 = vsub.s32 0, %v224
      %v226 = vrot.slane %v221, %v225
      %v228 = vadd.f32 %v183, %v226
      %v229 = vadd.f32 %v188, %v226
      %v230 = vadd.f32 %v193, %v226
      %v231 = vadd.f32 %v198, %v226
      %v232 = vadd.f32 %v203, %v226
      %v233 = vadd.f32 %v208, %v226
      %v234 = vadd.f32 %v213, %v226
      %v235 = vadd.f32 %v218, %v226
      %236 = vst.msk [vmem:[#allocation4] sm:$0xff] %vm84, %v228
      %237 = vst.msk [vmem:[#allocation4 + $0x8] sm:$0xff] %vm84, %v229
      %238 = vst.msk [vmem:[#allocation4 + $0x10] sm:$0xff] %vm84, %v230
      %239 = vst.msk [vmem:[#allocation4 + $0x18] sm:$0xff] %vm84, %v231
      %240 = vst.msk [vmem:[#allocation4 + $0x20] sm:$0xff] %vm84, %v232
      %241 = vst.msk [vmem:[#allocation4 + $0x28] sm:$0xff] %vm84, %v233
      %242 = vst.msk [vmem:[#allocation4 + $0x30] sm:$0xff] %vm84, %v234
      %243 = vst.msk [vmem:[#allocation4 + $0x38] sm:$0xff] %vm84, %v235
      %244 = vst [vmem:[#allocation5] sm:$0xff] 0.0
    $region61: #{seq2seq_decoder_decode.1} parent=1 // pred_fallthru
      _
    %v245 = vld [vmem:[%s0] sm:$0xff]
    %v246 = vld [vmem:[#allocation2] sm:$0xff]
    %v247 = vld [vmem:[#allocation3] sm:$0xff]
    %v248 = vld [vmem:[%s4] sm:$0xff]
    %v249 = vld [vmem:[%s4 + $0x8] sm:$0xff]
    %v250 = vld [vmem:[%s4 + $0x10] sm:$0xff]
    %v251 = vld [vmem:[%s4 + $0x18] sm:$0xff]
    %vm252 = vcmask 261120
    %v254 = vsel %vm252, %v246, 0
    %256 = vmatprep.subr.mxu0 0.0
    %257 = vmatpush1.msra.mxu0 %v248
    %258 = vmatprep.subr.mxu0 0.0
    %259 = vmatpush1.msra.mxu0 %v249
    %260 = vmatprep.subr.mxu0 0.0
    %261 = vmatpush1.msra.mxu0 %v250
    %262 = vmatprep.subr.mxu0 0.0
    %263 = vmatpush1.msra.mxu0 %v251
    %264 = vmatprep.subr.mxu0 0.0
    %265 = vmatpush1.msra.mxu0 0.0
    %266 = vmatprep.subr.mxu0 0.0
    %267 = vmatpush1.msra.mxu0 0.0
    %268 = vmatprep.subr.mxu0 0.0
    %269 = vmatpush1.msra.mxu0 0.0
    %270 = vmatprep.subr.mxu0 0.0
    %271 = vmatpush1.msra.mxu0 0.0
    %272 = vmatprep.subr.mxu0 0.0
    %273 = vmatpush1.msra.mxu0 0.0
    %274 = vmatprep.subr.mxu0 0.0
    %275 = vmatpush1.msra.mxu0 0.0
    %276 = vmatprep.subr.mxu0 0.0
    %277 = vmatpush1.msra.mxu0 0.0
    %278 = vmatprep.subr.mxu0 0.0
    %279 = vmatpush1.msra.mxu0 0.0
    %280 = vmatprep.subr.mxu0 0.0
    %281 = vmatpush1.msra.mxu0 0.0
    %282 = vmatprep.subr.mxu0 0.0
    %283 = vmatpush1.msra.mxu0 0.0
    %284 = vmatprep.subr.mxu0 0.0
    %285 = vmatpush1.msra.mxu0 0.0
    %286 = vmatprep.subr.mxu0 0.0
    %287 = vmatpush1.msra.mxu0 0.0
    %288 = vmatprep.subr.mxu0 0.0
    %289 = vmatpush1.msra.mxu0 0.0
    %290 = vmatprep.subr.mxu0 0.0
    %291 = vmatpush1.msra.mxu0 0.0
    %292 = vmatprep.subr.mxu0 0.0
    %293 = vmatpush1.msra.mxu0 0.0
    %294 = vmatprep.subr.mxu0 0.0
    %295 = vmatpush1.msra.mxu0 0.0
    %296 = vmatprep.subr.mxu0 0.0
    %297 = vmatpush1.msra.mxu0 0.0
    %298 = vmatprep.subr.mxu0 0.0
    %299 = vmatpush1.msra.mxu0 0.0
    %300 = vmatprep.subr.mxu0 0.0
    %301 = vmatpush1.msra.mxu0 0.0
    %302 = vmatprep.subr.mxu0 0.0
    %303 = vmatpush1.msra.mxu0 0.0
    %304 = vmatprep.subr.mxu0 0.0
    %305 = vmatpush1.msra.mxu0 0.0
    %306 = vmatprep.subr.mxu0 0.0
    %307 = vmatpush1.msra.mxu0 0.0
    %308 = vmatprep.subr.mxu0 0.0
    %309 = vmatpush1.msra.mxu0 0.0
    %310 = vmatprep.subr.mxu0 0.0
    %311 = vmatpush1.msra.mxu0 0.0
    %312 = vmatprep.subr.mxu0 0.0
    %313 = vmatpush1.msra.mxu0 0.0
    %314 = vmatprep.subr.mxu0 0.0
    %315 = vmatpush1.msra.mxu0 0.0
    %316 = vmatprep.subr.mxu0 0.0
    %317 = vmatpush1.msra.mxu0 0.0
    %318 = vmatprep.subr.mxu0 0.0
    %319 = vmatpush1.msra.mxu0 0.0
    %320 = vmatprep.mubr.f32.mxu0 0.0
    %321 = vmatmul.mubr.f32.gmra.mrb[0].mxu0 %v254
    %v322 = vpop.f32.mrb[0].mxu0
    %v323 = vadd.f32 0.0, %v322
    %v324 = vpop.f32.mrb[0].mxu0
    %325 = vdwg.mxu0
    %v327 = vcombine.high %v323, %v323
    %v329 = vunpack.c.l.s4 1966171168
    %v330 = vunpack.c.0.s8 %v329
    %v331 = vlaneseq
    %v332 = vshrl.u32 %v331, 7
    %v333 = vsub.s32 %v330, %v332
    %v334 = vrot.slane %v323, %v333
    %v336 = vunpack.c.l.s4 1966171168
    %v337 = vunpack.c.0.s8 %v336
    %v338 = vlaneseq
    %v339 = vshrl.u32 %v338, 7
    %v340 = vsub.s32 %v337, %v339
    %v341 = vrot.slane %v327, %v340
    %v342 = vcombine.high %v334, %v334
    %v343 = vcombine.high %v341, %v341
    %v345 = vunpack.c.l.s4 1966171168
    %v346 = vunpack.c.0.s8 %v345
    %v347 = vlaneseq
    %v348 = vshrl.u32 %v347, 7
    %v349 = vsub.s32 %v346, %v348
    %v350 = vrot.slane %v334, %v349
    %v352 = vunpack.c.l.s4 1966171168
    %v353 = vunpack.c.0.s8 %v352
    %v354 = vlaneseq
    %v355 = vshrl.u32 %v354, 7
    %v356 = vsub.s32 %v353, %v355
    %v357 = vrot.slane %v341, %v356
    %v359 = vunpack.c.l.s4 1966171168
    %v360 = vunpack.c.0.s8 %v359
    %v361 = vlaneseq
    %v362 = vshrl.u32 %v361, 7
    %v363 = vsub.s32 %v360, %v362
    %v364 = vrot.slane %v342, %v363
    %v366 = vunpack.c.l.s4 1966171168
    %v367 = vunpack.c.0.s8 %v366
    %v368 = vlaneseq
    %v369 = vshrl.u32 %v368, 7
    %v370 = vsub.s32 %v367, %v369
    %v371 = vrot.slane %v343, %v370
    %v372 = vcombine.high %v350, %v350
    %v373 = vcombine.high %v357, %v357
    %v374 = vcombine.high %v364, %v364
    %v375 = vcombine.high %v371, %v371
    %v376 = vld [vmem:[#allocation4] sm:$0xff]
    %v377 = vld [vmem:[#allocation4 + $0x8] sm:$0xff]
    %v378 = vld [vmem:[#allocation4 + $0x10] sm:$0xff]
    %v379 = vld [vmem:[#allocation4 + $0x18] sm:$0xff]
    %v380 = vld [vmem:[#allocation4 + $0x20] sm:$0xff]
    %v381 = vld [vmem:[#allocation4 + $0x28] sm:$0xff]
    %v382 = vld [vmem:[#allocation4 + $0x30] sm:$0xff]
    %v383 = vld [vmem:[#allocation4 + $0x38] sm:$0xff]
    %v384 = vlaneseq
    %v385 = vshrl.u32 %v384, 7
    %v386 = vsub.s32 0, %v385
    %v387 = vrot.slane %v350, %v386
    %v388 = vlaneseq
    %v389 = vshrl.u32 %v388, 7
    %v390 = vsub.s32 0, %v389
    %v391 = vrot.slane %v364, %v390
    %v392 = vlaneseq
    %v393 = vshrl.u32 %v392, 7
    %v394 = vsub.s32 0, %v393
    %v395 = vrot.slane %v372, %v394
    %v396 = vlaneseq
    %v397 = vshrl.u32 %v396, 7
    %v398 = vsub.s32 0, %v397
    %v399 = vrot.slane %v374, %v398
    %v400 = vlaneseq
    %v401 = vshrl.u32 %v400, 7
    %v402 = vsub.s32 0, %v401
    %v403 = vrot.slane %v357, %v402
    %v404 = vlaneseq
    %v405 = vshrl.u32 %v404, 7
    %v406 = vsub.s32 0, %v405
    %v407 = vrot.slane %v371, %v406
    %v408 = vlaneseq
    %v409 = vshrl.u32 %v408, 7
    %v410 = vsub.s32 0, %v409
    %v411 = vrot.slane %v373, %v410
    %v412 = vlaneseq
    %v413 = vshrl.u32 %v412, 7
    %v414 = vsub.s32 0, %v413
    %v415 = vrot.slane %v375, %v414
    %v424 = vadd.f32 %v387, %v376
    %v425 = vadd.f32 %v391, %v377
    %v426 = vadd.f32 %v395, %v378
    %v427 = vadd.f32 %v399, %v379
    %v428 = vadd.f32 %v403, %v380
    %v429 = vadd.f32 %v407, %v381
    %v430 = vadd.f32 %v411, %v382
    %v431 = vadd.f32 %v415, %v383
    %v432 = vtanh.pop %v424
    %v433 = vtanh.pop %v425
    %v434 = vtanh.pop %v426
    %v435 = vtanh.pop %v427
    %v436 = vtanh.pop %v428
    %v437 = vtanh.pop %v429
    %v438 = vtanh.pop %v430
    %v439 = vtanh.pop %v431
    %v440 = vld [vmem:[%s7] sm:$0x1]
    %v442 = vlaneseq
    %v443 = vshrl.u32 %v442, 7
    %v444 = vsub.s32 0, %v443
    %v445 = vrot.slane %v440, %v444
    %v447 = vmul.f32 %v432, %v445
    %v448 = vmul.f32 %v433, %v445
    %v449 = vmul.f32 %v434, %v445
    %v450 = vmul.f32 %v435, %v445
    %v451 = vmul.f32 %v436, %v445
    %v452 = vmul.f32 %v437, %v445
    %v453 = vmul.f32 %v438, %v445
    %v454 = vmul.f32 %v439, %v445
    %v455 = vsel %vm252, %v447, 0.0
    %456 = vadd.xlane.f32.xlu0 %v455
    %v457 = vpop.xlane.xlu0 %456
    %v458 = vsel %vm252, %v448, 0.0
    %459 = vadd.xlane.f32.xlu0 %v458
    %v460 = vpop.xlane.xlu0 %459
    %v461 = vsel %vm252, %v449, 0.0
    %462 = vadd.xlane.f32.xlu0 %v461
    %v463 = vpop.xlane.xlu0 %462
    %v464 = vsel %vm252, %v450, 0.0
    %465 = vadd.xlane.f32.xlu0 %v464
    %v466 = vpop.xlane.xlu0 %465
    %v467 = vsel %vm252, %v451, 0.0
    %468 = vadd.xlane.f32.xlu0 %v467
    %v469 = vpop.xlane.xlu0 %468
    %v470 = vsel %vm252, %v452, 0.0
    %471 = vadd.xlane.f32.xlu0 %v470
    %v472 = vpop.xlane.xlu0 %471
    %v473 = vsel %vm252, %v453, 0.0
    %474 = vadd.xlane.f32.xlu0 %v473
    %v475 = vpop.xlane.xlu0 %474
    %v476 = vsel %vm252, %v454, 0.0
    %477 = vadd.xlane.f32.xlu0 %v476
    %v478 = vpop.xlane.xlu0 %477
    %v487 = vlaneseq
    %v488 = vand.u32 %v487, 127
    %v489 = vlaneseq
    %v490 = vshrl.u32 %v489, 7
    %v491 = vsub.s32 %v488, %v490
    %v492 = vrot.slane %v457, %v491
    %v493 = vlaneseq
    %v494 = vshrl.u32 %v493, 7
    %v495 = vsub.s32 %v488, %v494
    %v496 = vrot.slane %v460, %v495
    %v497 = vlaneseq
    %v498 = vshrl.u32 %v497, 7
    %v499 = vsub.s32 %v488, %v498
    %v500 = vrot.slane %v463, %v499
    %v501 = vlaneseq
    %v502 = vshrl.u32 %v501, 7
    %v503 = vsub.s32 %v488, %v502
    %v504 = vrot.slane %v466, %v503
    %v505 = vlaneseq
    %v506 = vshrl.u32 %v505, 7
    %v507 = vsub.s32 %v488, %v506
    %v508 = vrot.slane %v469, %v507
    %v509 = vlaneseq
    %v510 = vshrl.u32 %v509, 7
    %v511 = vsub.s32 %v488, %v510
    %v512 = vrot.slane %v472, %v511
    %v513 = vlaneseq
    %v514 = vshrl.u32 %v513, 7
    %v515 = vsub.s32 %v488, %v514
    %v516 = vrot.slane %v475, %v515
    %v517 = vlaneseq
    %v518 = vshrl.u32 %v517, 7
    %v519 = vsub.s32 %v488, %v518
    %v520 = vrot.slane %v478, %v519
    %vm521 = vcmask 1041409
    %v522 = vsel %vm521, %v496, %v492
    %vm523 = vcmask 1042434
    %v524 = vsel %vm523, %v500, %v522
    %vm525 = vcmask 1043459
    %v526 = vsel %vm525, %v504, %v524
    %vm527 = vcmask 1044484
    %v528 = vsel %vm527, %v508, %v526
    %vm529 = vcmask 1045509
    %v530 = vsel %vm529, %v512, %v528
    %vm531 = vcmask 1046534
    %v532 = vsel %vm531, %v516, %v530
    %vm533 = vcmask 1047559
    %v534 = vsel %vm533, %v520, %v532
    %vm536 = vcmask 64512
    %v537 = vsel %vm536, %v534, -inf
    %538 = vmax.xlane.f32.xlu0 %v537
    %v539 = vpop.xlane.xlu0 %538
    %v541 = vlaneseq
    %v542 = vshrl.u32 %v541, 7
    %v543 = vsub.s32 0, %v542
    %v544 = vrot.slane %v539, %v543
    %v545 = vlaneseq
    %v546 = vshrl.u32 %v545, 7
    %v547 = vsub.s32 1, %v546
    %v548 = vrot.slane %v539, %v547
    %v549 = vlaneseq
    %v550 = vshrl.u32 %v549, 7
    %v551 = vsub.s32 2, %v550
    %v552 = vrot.slane %v539, %v551
    %v553 = vlaneseq
    %v554 = vshrl.u32 %v553, 7
    %v555 = vsub.s32 3, %v554
    %v556 = vrot.slane %v539, %v555
    %v557 = vlaneseq
    %v558 = vshrl.u32 %v557, 7
    %v559 = vsub.s32 4, %v558
    %v560 = vrot.slane %v539, %v559
    %v561 = vlaneseq
    %v562 = vshrl.u32 %v561, 7
    %v563 = vsub.s32 5, %v562
    %v564 = vrot.slane %v539, %v563
    %v565 = vlaneseq
    %v566 = vshrl.u32 %v565, 7
    %v567 = vsub.s32 6, %v566
    %v568 = vrot.slane %v539, %v567
    %v569 = vlaneseq
    %v570 = vshrl.u32 %v569, 7
    %v571 = vsub.s32 7, %v570
    %v572 = vrot.slane %v539, %v571
    %v581 = vsub.f32 %v457, %v544
    %v582 = vsub.f32 %v460, %v548
    %v583 = vsub.f32 %v463, %v552
    %v584 = vsub.f32 %v466, %v556
    %v585 = vsub.f32 %v469, %v560
    %v586 = vsub.f32 %v472, %v564
    %v587 = vsub.f32 %v475, %v568
    %v588 = vsub.f32 %v478, %v572
    %v589 = vmul.f32 %v581, 1.442695
    %v590 = vpow.pop %v589
    %v591 = vmul.f32 %v582, 1.442695
    %v592 = vpow.pop %v591
    %v593 = vmul.f32 %v583, 1.442695
    %v594 = vpow.pop %v593
    %v595 = vmul.f32 %v584, 1.442695
    %v596 = vpow.pop %v595
    %v597 = vmul.f32 %v585, 1.442695
    %v598 = vpow.pop %v597
    %v599 = vmul.f32 %v586, 1.442695
    %v600 = vpow.pop %v599
    %v601 = vmul.f32 %v587, 1.442695
    %v602 = vpow.pop %v601
    %v603 = vmul.f32 %v588, 1.442695
    %v604 = vpow.pop %v603
    %613 = vset.pattern.permute.xlu0 0
    %614 = vperm.xlu0 %613, %v590
    %v615 = vpop.permute.xlu0 %614
    %616 = vset.pattern.permute.xlu0 0
    %617 = vperm.xlu0 %616, %v592
    %v618 = vpop.permute.xlu0 %617
    %619 = vset.pattern.permute.xlu0 0
    %620 = vperm.xlu0 %619, %v594
    %v621 = vpop.permute.xlu0 %620
    %622 = vset.pattern.permute.xlu0 0
    %623 = vperm.xlu0 %622, %v596
    %v624 = vpop.permute.xlu0 %623
    %625 = vset.pattern.permute.xlu0 0
    %626 = vperm.xlu0 %625, %v598
    %v627 = vpop.permute.xlu0 %626
    %628 = vset.pattern.permute.xlu0 0
    %629 = vperm.xlu0 %628, %v600
    %v630 = vpop.permute.xlu0 %629
    %631 = vset.pattern.permute.xlu0 0
    %632 = vperm.xlu0 %631, %v602
    %v633 = vpop.permute.xlu0 %632
    %634 = vset.pattern.permute.xlu0 0
    %635 = vperm.xlu0 %634, %v604
    %v636 = vpop.permute.xlu0 %635
    %v637 = vlaneseq
    %v638 = vshrl.u32 %v637, 7
    %v639 = vsub.s32 %v488, %v638
    %v640 = vrot.slane %v615, %v639
    %v641 = vlaneseq
    %v642 = vshrl.u32 %v641, 7
    %v643 = vsub.s32 %v488, %v642
    %v644 = vrot.slane %v618, %v643
    %v645 = vlaneseq
    %v646 = vshrl.u32 %v645, 7
    %v647 = vsub.s32 %v488, %v646
    %v648 = vrot.slane %v621, %v647
    %v649 = vlaneseq
    %v650 = vshrl.u32 %v649, 7
    %v651 = vsub.s32 %v488, %v650
    %v652 = vrot.slane %v624, %v651
    %v653 = vlaneseq
    %v654 = vshrl.u32 %v653, 7
    %v655 = vsub.s32 %v488, %v654
    %v656 = vrot.slane %v627, %v655
    %v657 = vlaneseq
    %v658 = vshrl.u32 %v657, 7
    %v659 = vsub.s32 %v488, %v658
    %v660 = vrot.slane %v630, %v659
    %v661 = vlaneseq
    %v662 = vshrl.u32 %v661, 7
    %v663 = vsub.s32 %v488, %v662
    %v664 = vrot.slane %v633, %v663
    %v665 = vlaneseq
    %v666 = vshrl.u32 %v665, 7
    %v667 = vsub.s32 %v488, %v666
    %v668 = vrot.slane %v636, %v667
    %v669 = vsel %vm521, %v644, %v640
    %v670 = vsel %vm523, %v648, %v669
    %v671 = vsel %vm525, %v652, %v670
    %v672 = vsel %vm527, %v656, %v671
    %v673 = vsel %vm529, %v660, %v672
    %v674 = vsel %vm531, %v664, %v673
    %v675 = vsel %vm533, %v668, %v674
    %v677 = vsel %vm536, %v675, 0.0
    %678 = vadd.xlane.f32.xlu0 %v677
    %v679 = vpop.xlane.xlu0 %678
    %v680 = vrcp.pop %v679
    %v682 = vlaneseq
    %v683 = vshrl.u32 %v682, 7
    %v684 = vsub.s32 0, %v683
    %v685 = vrot.slane %v680, %v684
    %v686 = vlaneseq
    %v687 = vshrl.u32 %v686, 7
    %v688 = vsub.s32 1, %v687
    %v689 = vrot.slane %v680, %v688
    %v690 = vlaneseq
    %v691 = vshrl.u32 %v690, 7
    %v692 = vsub.s32 2, %v691
    %v693 = vrot.slane %v680, %v692
    %v694 = vlaneseq
    %v695 = vshrl.u32 %v694, 7
    %v696 = vsub.s32 3, %v695
    %v697 = vrot.slane %v680, %v696
    %v698 = vlaneseq
    %v699 = vshrl.u32 %v698, 7
    %v700 = vsub.s32 4, %v699
    %v701 = vrot.slane %v680, %v700
    %v702 = vlaneseq
    %v703 = vshrl.u32 %v702, 7
    %v704 = vsub.s32 5, %v703
    %v705 = vrot.slane %v680, %v704
    %v706 = vlaneseq
    %v707 = vshrl.u32 %v706, 7
    %v708 = vsub.s32 6, %v707
    %v709 = vrot.slane %v680, %v708
    %v710 = vlaneseq
    %v711 = vshrl.u32 %v710, 7
    %v712 = vsub.s32 7, %v711
    %v713 = vrot.slane %v680, %v712
    %v722 = vmul.f32 %v590, %v685
    %v723 = vmul.f32 %v592, %v689
    %v724 = vmul.f32 %v594, %v693
    %v725 = vmul.f32 %v596, %v697
    %v726 = vmul.f32 %v598, %v701
    %v727 = vmul.f32 %v600, %v705
    %v728 = vmul.f32 %v602, %v709
    %v729 = vmul.f32 %v604, %v713
    %731 = vset.pattern.permute.xlu0 0
    %732 = vperm.xlu0 %731, %v722
    %v733 = vpop.permute.xlu0 %732
    %736 = vset.pattern.permute.xlu0 0
    %737 = vperm.xlu0 %736, %v723
    %v738 = vpop.permute.xlu0 %737
    %741 = vset.pattern.permute.xlu0 0
    %742 = vperm.xlu0 %741, %v724
    %v743 = vpop.permute.xlu0 %742
    %746 = vset.pattern.permute.xlu0 0
    %747 = vperm.xlu0 %746, %v725
    %v748 = vpop.permute.xlu0 %747
    %751 = vset.pattern.permute.xlu0 0
    %752 = vperm.xlu0 %751, %v726
    %v753 = vpop.permute.xlu0 %752
    %756 = vset.pattern.permute.xlu0 0
    %757 = vperm.xlu0 %756, %v727
    %v758 = vpop.permute.xlu0 %757
    %761 = vset.pattern.permute.xlu0 0
    %762 = vperm.xlu0 %761, %v728
    %v763 = vpop.permute.xlu0 %762
    %766 = vset.pattern.permute.xlu0 0
    %767 = vperm.xlu0 %766, %v729
    %v768 = vpop.permute.xlu0 %767
    %v770 = vmul.f32 %v733, %v71
    %v771 = vmul.f32 %v738, %v72
    %v772 = vmul.f32 %v743, %v73
    %v773 = vmul.f32 %v748, %v74
    %v774 = vmul.f32 %v753, %v75
    %v775 = vmul.f32 %v758, %v76
    %v776 = vmul.f32 %v763, %v77
    %v777 = vmul.f32 %v768, %v78
    %v778 = vsel %vm252, %v770, 0.0
    %v779 = vrot.slane %v778, 4
    %v780 = vadd.f32 %v778, %v779
    %v781 = vrot.slane %v780, 2
    %v782 = vadd.f32 %v780, %v781
    %v783 = vrot.slane %v782, 1
    %v784 = vadd.f32 %v782, %v783
    %v785 = vsel %vm252, %v771, 0.0
    %v786 = vrot.slane %v785, 4
    %v787 = vadd.f32 %v785, %v786
    %v788 = vrot.slane %v787, 2
    %v789 = vadd.f32 %v787, %v788
    %v790 = vrot.slane %v789, 1
    %v791 = vadd.f32 %v789, %v790
    %v792 = vsel %vm252, %v772, 0.0
    %v793 = vrot.slane %v792, 4
    %v794 = vadd.f32 %v792, %v793
    %v795 = vrot.slane %v794, 2
    %v796 = vadd.f32 %v794, %v795
    %v797 = vrot.slane %v796, 1
    %v798 = vadd.f32 %v796, %v797
    %v799 = vsel %vm252, %v773, 0.0
    %v800 = vrot.slane %v799, 4
    %v801 = vadd.f32 %v799, %v800
    %v802 = vrot.slane %v801, 2
    %v803 = vadd.f32 %v801, %v802
    %v804 = vrot.slane %v803, 1
    %v805 = vadd.f32 %v803, %v804
    %v806 = vsel %vm252, %v774, 0.0
    %v807 = vrot.slane %v806, 4
    %v808 = vadd.f32 %v806, %v807
    %v809 = vrot.slane %v808, 2
    %v810 = vadd.f32 %v808, %v809
    %v811 = vrot.slane %v810, 1
    %v812 = vadd.f32 %v810, %v811
    %v813 = vsel %vm252, %v775, 0.0
    %v814 = vrot.slane %v813, 4
    %v815 = vadd.f32 %v813, %v814
    %v816 = vrot.slane %v815, 2
    %v817 = vadd.f32 %v815, %v816
    %v818 = vrot.slane %v817, 1
    %v819 = vadd.f32 %v817, %v818
    %v820 = vsel %vm252, %v776, 0.0
    %v821 = vrot.slane %v820, 4
    %v822 = vadd.f32 %v820, %v821
    %v823 = vrot.slane %v822, 2
    %v824 = vadd.f32 %v822, %v823
    %v825 = vrot.slane %v824, 1
    %v826 = vadd.f32 %v824, %v825
    %v827 = vsel %vm252, %v777, 0.0
    %v828 = vrot.slane %v827, 4
    %v829 = vadd.f32 %v827, %v828
    %v830 = vrot.slane %v829, 2
    %v831 = vadd.f32 %v829, %v830
    %v832 = vrot.slane %v831, 1
    %v833 = vadd.f32 %v831, %v832
    %vm834 = vcmask 130048
    %835 = vst.msk [vmem:[#allocation5] sm:$0xff] %vm834, %v245
    %v844 = vsel %vm521, %v791, %v784
    %v845 = vsel %vm523, %v798, %v844
    %v846 = vsel %vm525, %v805, %v845
    %v847 = vsel %vm527, %v812, %v846
    %v848 = vsel %vm529, %v819, %v847
    %v849 = vsel %vm531, %v826, %v848
    %v850 = vsel %vm533, %v833, %v849
    %851 = vrot.lane.b32.xlu0 %v850, 16
    %v852 = vpop.permute.xlu0 %851
    %vm854 = vcmask 392320
    %855 = vst.msk [vmem:[#allocation5] sm:$0xff] %vm854, %v852
    %856 = vrot.lane.b32.xlu0 %v246, 48
    %v857 = vpop.permute.xlu0 %856
    %vm859 = vcmask 654720
    %860 = vst.msk [vmem:[#allocation5] sm:$0xff] %vm859, %v857
    %v861 = vld [vmem:[#allocation5] sm:$0xff]
    %v862 = vpack.c.bf16 %v861, %v861
    %v863 = vld [vmem:[%s8] sm:$0xf]
    %v864 = vld [vmem:[%s8 + $0x4] sm:$0xf]
    %v865 = vld [vmem:[%s8 + $0x8] sm:$0xf]
    %v866 = vld [vmem:[%s8 + $0xc] sm:$0xf]
    %v867 = vld [vmem:[%s8 + $0x10] sm:$0xf]
    %v868 = vld [vmem:[%s8 + $0x14] sm:$0xf]
    %v869 = vld [vmem:[%s8 + $0x18] sm:$0xf]
    %v870 = vld [vmem:[%s8 + $0x1c] sm:$0xf]
    %v871 = vld [vmem:[%s8 + $0x20] sm:$0xf]
    %v872 = vld [vmem:[%s8 + $0x24] sm:$0xf]
    %v873 = vld [vmem:[%s8 + $0x28] sm:$0xf]
    %v874 = vld [vmem:[%s8 + $0x2c] sm:$0xf]
    %v875 = vld [vmem:[%s8 + $0x30] sm:$0xf]
    %v876 = vld [vmem:[%s8 + $0x34] sm:$0xf]
    %v877 = vld [vmem:[%s8 + $0x38] sm:$0xf]
    %v878 = vld [vmem:[%s8 + $0x3c] sm:$0xf]
    %v879 = vld [vmem:[%s9] sm:$0x1]
    %v881 = vlaneseq
    %v882 = vshrl.u32 %v881, 7
    %v883 = vsub.s32 0, %v882
    %v884 = vrot.slane %v879, %v883
    %v902 = vunpack.c.l.b16 %v863
    %v903 = vunpack.c.l.b16 %v864
    %v904 = vunpack.c.l.b16 %v865
    %v905 = vunpack.c.l.b16 %v866
    %v906 = vunpack.c.l.b16 %v867
    %v907 = vunpack.c.l.b16 %v868
    %v908 = vunpack.c.l.b16 %v869
    %v909 = vunpack.c.l.b16 %v870
    %v910 = vunpack.c.l.b16 %v871
    %v911 = vunpack.c.l.b16 %v872
    %v912 = vunpack.c.l.b16 %v873
    %v913 = vunpack.c.l.b16 %v874
    %v914 = vunpack.c.l.b16 %v875
    %v915 = vunpack.c.l.b16 %v876
    %v916 = vunpack.c.l.b16 %v877
    %v917 = vunpack.c.l.b16 %v878
    %v918 = vpack.c.b16 %v903, %v902
    %v919 = vpack.c.b16 %v905, %v904
    %v920 = vpack.c.b16 %v907, %v906
    %v921 = vpack.c.b16 %v909, %v908
    %v922 = vpack.c.b16 %v911, %v910
    %v923 = vpack.c.b16 %v913, %v912
    %v924 = vpack.c.b16 %v915, %v914
    %v925 = vpack.c.b16 %v917, %v916
    %934 = vmatprep.subr.bf16.mxu0 0
    %935 = vmatpush1.bf16.msra.mxu0 %v918
    %936 = vmatprep.subr.bf16.mxu0 0
    %937 = vmatpush1.bf16.msra.mxu0 %v919
    %938 = vmatprep.subr.bf16.mxu0 0
    %939 = vmatpush1.bf16.msra.mxu0 %v920
    %940 = vmatprep.subr.bf16.mxu0 0
    %941 = vmatpush1.bf16.msra.mxu0 %v921
    %942 = vmatprep.subr.bf16.mxu0 0
    %943 = vmatpush1.bf16.msra.mxu0 %v922
    %944 = vmatprep.subr.bf16.mxu0 0
    %945 = vmatpush1.bf16.msra.mxu0 %v923
    %946 = vmatprep.subr.bf16.mxu0 0
    %947 = vmatpush1.bf16.msra.mxu0 %v924
    %948 = vmatprep.subr.bf16.mxu0 0
    %949 = vmatpush1.bf16.msra.mxu0 %v925
    %950 = vmatprep.subr.bf16.mxu0 0
    %951 = vmatpush1.bf16.msra.mxu0 0
    %952 = vmatprep.subr.bf16.mxu0 0
    %953 = vmatpush1.bf16.msra.mxu0 0
    %954 = vmatprep.subr.bf16.mxu0 0
    %955 = vmatpush1.bf16.msra.mxu0 0
    %956 = vmatprep.subr.bf16.mxu0 0
    %957 = vmatpush1.bf16.msra.mxu0 0
    %958 = vmatprep.subr.bf16.mxu0 0
    %959 = vmatpush1.bf16.msra.mxu0 0
    %960 = vmatprep.subr.bf16.mxu0 0
    %961 = vmatpush1.bf16.msra.mxu0 0
    %962 = vmatprep.subr.bf16.mxu0 0
    %963 = vmatpush1.bf16.msra.mxu0 0
    %964 = vmatprep.subr.bf16.mxu0 0
    %965 = vmatpush1.bf16.msra.mxu0 0
    %966 = vmatprep.mubr.bf16.mxu0 0
    %967 = vmatmul.mubr.bf16.gmra.mrb[0].mxu0 %v862
    %v968 = vpop.f32.mrb[0].mxu0
    %v969 = vadd.f32 %v884, %v968
    %v970 = vpop.f32.mrb[0].mxu0
    %v971 = vpop.f32.mrb[0].mxu0
    %v972 = vpop.f32.mrb[0].mxu0
    %973 = vdwg.mxu0
    %v974 = vxor.u32 %v969, 2147483648
    %v975 = vmul.f32 %v974, 1.442695
    %v976 = vpow.pop %v975
    %v977 = vadd.f32 %v976, 1.0
    %v978 = vrcp.pop %v977
    %v979 = vmul.f32 1.0, %v978
    %v980 = vtanh.pop %v969
    %982 = vrot.lane.b32.xlu0 %v247, 32
    %v983 = vpop.permute.xlu0 %982
    %v985 = vmul.f32 %v979, %v983
    %987 = vrot.lane.b32.xlu0 %v980, 64
    %v988 = vpop.permute.xlu0 %987
    %v990 = vmul.f32 %v979, %v988
    %992 = vrot.lane.b32.xlu0 %v990, 32
    %v993 = vpop.permute.xlu0 %992
    %v995 = vadd.f32 %v985, %v993
    %v996 = vtanh.pop %v995
    %998 = vrot.lane.b32.xlu0 %v996, 64
    %v999 = vpop.permute.xlu0 %998
    %v1001 = vmul.f32 %v979, %v999
    %1003 = vrot.lane.b32.xlu0 %v1001, 80
    %v1004 = vpop.permute.xlu0 %1003
    %1006 = vst.msk [vmem:[#allocation5] sm:$0xff] %vm859, %v1004
    %v1007 = vld [vmem:[#allocation5] sm:$0xff]
    %v1008 = vpack.c.bf16 %v1007, %v1007
    %v1009 = vld [vmem:[%s10] sm:$0xf]
    %v1010 = vld [vmem:[%s10 + $0x4] sm:$0xf]
    %v1011 = vld [vmem:[%s10 + $0x8] sm:$0xf]
    %v1012 = vld [vmem:[%s10 + $0xc] sm:$0xf]
    %v1013 = vld [vmem:[%s10 + $0x10] sm:$0xf]
    %v1014 = vld [vmem:[%s10 + $0x14] sm:$0xf]
    %v1015 = vld [vmem:[%s10 + $0x18] sm:$0xf]
    %v1016 = vld [vmem:[%s10 + $0x1c] sm:$0xf]
    %v1017 = vld [vmem:[%s10 + $0x20] sm:$0xf]
    %v1018 = vld [vmem:[%s10 + $0x24] sm:$0xf]
    %v1019 = vld [vmem:[%s10 + $0x28] sm:$0xf]
    %v1020 = vld [vmem:[%s10 + $0x2c] sm:$0xf]
    %v1021 = vld [vmem:[%s10 + $0x30] sm:$0xf]
    %v1022 = vld [vmem:[%s10 + $0x34] sm:$0xf]
    %v1023 = vld [vmem:[%s10 + $0x38] sm:$0xf]
    %v1024 = vld [vmem:[%s10 + $0x3c] sm:$0xf]
    %v1025 = vld [vmem:[#allocation8] sm:$0x1]
    %v1027 = vlaneseq
    %v1028 = vshrl.u32 %v1027, 7
    %v1029 = vsub.s32 0, %v1028
    %v1030 = vrot.slane %v1025, %v1029
    %v1048 = vunpack.c.l.b16 %v1009
    %v1049 = vunpack.c.l.b16 %v1010
    %v1050 = vunpack.c.l.b16 %v1011
    %v1051 = vunpack.c.l.b16 %v1012
    %v1052 = vunpack.c.l.b16 %v1013
    %v1053 = vunpack.c.l.b16 %v1014
    %v1054 = vunpack.c.l.b16 %v1015
    %v1055 = vunpack.c.l.b16 %v1016
    %v1056 = vunpack.c.l.b16 %v1017
    %v1057 = vunpack.c.l.b16 %v1018
    %v1058 = vunpack.c.l.b16 %v1019
    %v1059 = vunpack.c.l.b16 %v1020
    %v1060 = vunpack.c.l.b16 %v1021
    %v1061 = vunpack.c.l.b16 %v1022
    %v1062 = vunpack.c.l.b16 %v1023
    %v1063 = vunpack.c.l.b16 %v1024
    %v1064 = vpack.c.b16 %v1049, %v1048
    %v1065 = vpack.c.b16 %v1051, %v1050
    %v1066 = vpack.c.b16 %v1053, %v1052
    %v1067 = vpack.c.b16 %v1055, %v1054
    %v1068 = vpack.c.b16 %v1057, %v1056
    %v1069 = vpack.c.b16 %v1059, %v1058
    %v1070 = vpack.c.b16 %v1061, %v1060
    %v1071 = vpack.c.b16 %v1063, %v1062
    %1080 = vmatprep.subr.bf16.mxu0 0
    %1081 = vmatpush1.bf16.msra.mxu0 %v1064
    %1082 = vmatprep.subr.bf16.mxu0 0
    %1083 = vmatpush1.bf16.msra.mxu0 %v1065
    %1084 = vmatprep.subr.bf16.mxu0 0
    %1085 = vmatpush1.bf16.msra.mxu0 %v1066
    %1086 = vmatprep.subr.bf16.mxu0 0
    %1087 = vmatpush1.bf16.msra.mxu0 %v1067
    %1088 = vmatprep.subr.bf16.mxu0 0
    %1089 = vmatpush1.bf16.msra.mxu0 %v1068
    %1090 = vmatprep.subr.bf16.mxu0 0
    %1091 = vmatpush1.bf16.msra.mxu0 %v1069
    %1092 = vmatprep.subr.bf16.mxu0 0
    %1093 = vmatpush1.bf16.msra.mxu0 %v1070
    %1094 = vmatprep.subr.bf16.mxu0 0
    %1095 = vmatpush1.bf16.msra.mxu0 %v1071
    %1096 = vmatprep.subr.bf16.mxu0 0
    %1097 = vmatpush1.bf16.msra.mxu0 0
    %1098 = vmatprep.subr.bf16.mxu0 0
    %1099 = vmatpush1.bf16.msra.mxu0 0
    %1100 = vmatprep.subr.bf16.mxu0 0
    %1101 = vmatpush1.bf16.msra.mxu0 0
    %1102 = vmatprep.subr.bf16.mxu0 0
    %1103 = vmatpush1.bf16.msra.mxu0 0
    %1104 = vmatprep.subr.bf16.mxu0 0
    %1105 = vmatpush1.bf16.msra.mxu0 0
    %1106 = vmatprep.subr.bf16.mxu0 0
    %1107 = vmatpush1.bf16.msra.mxu0 0
    %1108 = vmatprep.subr.bf16.mxu0 0
    %1109 = vmatpush1.bf16.msra.mxu0 0
    %1110 = vmatprep.subr.bf16.mxu0 0
    %1111 = vmatpush1.bf16.msra.mxu0 0
    %1112 = vmatprep.mubr.bf16.mxu0 0
    %1113 = vmatmul.mubr.bf16.gmra.mrb[0].mxu0 %v1008
    %v1114 = vpop.f32.mrb[0].mxu0
    %v1115 = vadd.f32 %v1030, %v1114
    %v1116 = vpop.f32.mrb[0].mxu0
    %v1117 = vpop.f32.mrb[0].mxu0
    %v1118 = vpop.f32.mrb[0].mxu0
    %1119 = vdwg.mxu0
    %1120 = vst [vmem:[%s12] sm:$0xff] %v1115
    %1121 = vrot.lane.b32.xlu0 %v1001, 32
    %v1122 = vpop.permute.xlu0 %1121
    %1124 = vst.msk [vmem:[#allocation2] sm:$0xff] %vm252, %v1122
    %1126 = vrot.lane.b32.xlu0 %v995, 96
    %v1127 = vpop.permute.xlu0 %1126
    %1129 = vst.msk [vmem:[#allocation3] sm:$0xff] %vm252, %v1127
    %1130 = vst.msk [vmem:[%s13] sm:$0xff] %vm252, %v1122
    %1131 = vst.msk [vmem:[%s14] sm:$0xff] %vm252, %v1127
    // Predicated region
    $region62: #{seq2seq_decoder_decode.1} parent=1 // pred_check
      _
    $region63: #{seq2seq_decoder_decode.1} parent=1 // pred_check_branch
      %1133 = sbr.rel (0) target = $region65
    $region64: #{seq2seq_decoder_decode.1} parent=1 // pred_region
      _
    $region65: #{seq2seq_decoder_decode.1} parent=1 // pred_fallthru
      _
    // Predicated region
    $region66: #{seq2seq_decoder_decode.1} parent=1 // pred_check
      _
    $region67: #{seq2seq_decoder_decode.1} parent=1 // pred_check_branch
      %1135 = sbr.rel (0) target = $region69
    $region68: #{seq2seq_decoder_decode.1} parent=1 // pred_region
      _
    $region69: #{seq2seq_decoder_decode.1} parent=1 // pred_fallthru
      _
    // Predicated region
    $region70: #{seq2seq_decoder_decode.1} parent=1 // pred_check
      _
    $region71: #{seq2seq_decoder_decode.1} parent=1 // pred_check_branch
      %1137 = sbr.rel (0) target = $region73
    $region72: #{seq2seq_decoder_decode.1} parent=1 // pred_region
      _
    $region73: #{seq2seq_decoder_decode.1} parent=1 // pred_fallthru
      _
    // Predicated region
    $region74: #{seq2seq_decoder_decode.1} parent=1 // pred_check
      _
    $region75: #{seq2seq_decoder_decode.1} parent=1 // pred_check_branch
      %1139 = sbr.rel (0) target = $region77
    $region76: #{seq2seq_decoder_decode.1} parent=1 // pred_region
      _
    $region77: #{seq2seq_decoder_decode.1} parent=1 // pred_fallthru
      _
    // Predicated region
    $region78: #{seq2seq_decoder_decode.1} parent=1 // pred_check
      _
    $region79: #{seq2seq_decoder_decode.1} parent=1 // pred_check_branch
      %1141 = sbr.rel (0) target = $region81
    $region80: #{seq2seq_decoder_decode.1} parent=1 // pred_region
      _
    $region81: #{seq2seq_decoder_decode.1} parent=1 // pred_fallthru
      _
    // Predicated region
    $region82: #{seq2seq_decoder_decode.1} parent=1 // pred_check
      _
    $region83: #{seq2seq_decoder_decode.1} parent=1 // pred_check_branch
      %1143 = sbr.rel (0) target = $region85
    $region84: #{seq2seq_decoder_decode.1} parent=1 // pred_region
      _
    $region85: #{seq2seq_decoder_decode.1} parent=1 // pred_fallthru
      _
    %1144 = vsyncpa [#allocation7], 1
    %1145 = vsyncpa [#allocation9], 1

</llo_original>
